<compile_context>
chip_gen: v7x
topology: tpu7x:2x2x1
jax: 0.10.0
libtpu: 0.0.40
codegen_flags: <defaults>
</compile_context>

<pallas_src>
import functools

import numpy as np

import jax
import jax.numpy as jnp
from jax.experimental import pallas as pl
from jax.experimental.pallas import tpu as pltpu


# ---------------------------------------------------------------------------
# Pallas kernel: centered 2-D DFT of a block of `tb` complex images.
# ---------------------------------------------------------------------------
def _cdft2_kernel(xr_ref, xi_ref, dytr_ref, dyti_ref, dxtr_ref, dxti_ref,
                  kr_ref, ki_ref, *, tb, nx, ny):
    # Image block, real / imaginary parts: (tb, nx, ny), flattened for the MXU.
    xr = xr_ref[...].reshape(tb * nx, ny)
    xi = xi_ref[...].reshape(tb * nx, ny)
    dytr = dytr_ref[...]   # Dy^T real, (ny, ny)
    dyti = dyti_ref[...]   # Dy^T imag
    dxtr = dxtr_ref[...]   # Dx^T real (scalar weight folded in), (nx, nx)
    dxti = dxti_ref[...]   # Dx^T imag

    # Stage 1: A = X @ Dy^T   (contract over y, the lane axis).
    ar = (jnp.dot(xr, dytr, preferred_element_type=jnp.float32)
          - jnp.dot(xi, dyti, preferred_element_type=jnp.float32))
    ai = (jnp.dot(xr, dyti, preferred_element_type=jnp.float32)
          + jnp.dot(xi, dytr, preferred_element_type=jnp.float32))

    # Stage 2: Y = Dx @ A, computed per channel as (A^T @ Dx^T)^T so both
    # contractions are plain 2-D matmuls; the minor-dim transposes go to the
    # XLU, which has slack while the MXU is busy.
    ar_t = jnp.swapaxes(ar.reshape(tb, nx, ny), 1, 2).reshape(tb * ny, nx)
    ai_t = jnp.swapaxes(ai.reshape(tb, nx, ny), 1, 2).reshape(tb * ny, nx)
    yr_t = (jnp.dot(ar_t, dxtr, preferred_element_type=jnp.float32)
            - jnp.dot(ai_t, dxti, preferred_element_type=jnp.float32))
    yi_t = (jnp.dot(ar_t, dxti, preferred_element_type=jnp.float32)
            + jnp.dot(ai_t, dxtr, preferred_element_type=jnp.float32))

    kr_ref[...] = jnp.swapaxes(yr_t.reshape(tb, ny, nx), 1, 2)
    ki_ref[...] = jnp.swapaxes(yi_t.reshape(tb, ny, nx), 1, 2)


# ---------------------------------------------------------------------------
# Host-side helpers.
# ---------------------------------------------------------------------------
def _centered_dft_matrix(n, inverse):
    """Matrix of fftshift(fft(ifftshift(x), norm='ortho')) (or the ifft)."""
    k = np.arange(n)
    sf = n // 2          # fftshift roll
    si = (n + 1) // 2    # ifftshift roll
    sign = 1.0 if inverse else -1.0
    phase = sign * 2.0 * np.pi * np.outer(k - sf, k + si) / n
    return np.exp(1j * phase) / np.sqrt(n)   # complex128, (n, n), unitary


def _centered_fft2_pallas(data, *, inverse=False, scale=1.0, block_channels=8):
    """Centered ortho 2-D (i)FFT over the spatial dims of a 5-D/6-D tensor."""
    nd = data.ndim
    if nd == 5:
        perm = (0, 3, 1, 2, 4)           # [B,x,y,e,2]   -> [B,e,x,y,2]
    elif nd == 6:
        perm = (0, 3, 4, 1, 2, 5)        # [B,x,y,t,e,2] -> [B,t,e,x,y,2]
    else:
        raise ValueError("expected a 5-D or 6-D tensor with trailing dim 2")
    if data.shape[-1] != 2:
        raise ValueError("last dimension must hold real/imag (size 2)")
    inv_perm = tuple(int(i) for i in np.argsort(perm))

    xp = jnp.transpose(data.astype(jnp.float32), perm)    # [..., nx, ny, 2]
    lead_shape = xp.shape[:-3]
    nx, ny = int(xp.shape[-3]), int(xp.shape[-2])
    c = int(np.prod(lead_shape)) if lead_shape else 1
    xp = xp.reshape(c, nx, ny, 2)

    tb = max(1, min(int(block_channels), c))
    c_pad = ((c + tb - 1) // tb) * tb
    if c_pad != c:                          # zero-pad channels; DFT(0)=0
        xp = jnp.pad(xp, ((0, c_pad - c), (0, 0), (0, 0), (0, 0)))
    xr = xp[..., 0]
    xi = xp[..., 1]

    # Centered DFT matrices (built in float64, cast to f32); fold scalar weight.
    dx = _centered_dft_matrix(nx, inverse) * float(scale)
    dy = _centered_dft_matrix(ny, inverse)
    dxt = np.ascontiguousarray(dx.T)
    dyt = np.ascontiguousarray(dy.T)
    dxtr = jnp.asarray(dxt.real, dtype=jnp.float32)
    dxti = jnp.asarray(dxt.imag, dtype=jnp.float32)
    dytr = jnp.asarray(dyt.real, dtype=jnp.float32)
    dyti = jnp.asarray(dyt.imag, dtype=jnp.float32)

    kernel = functools.partial(_cdft2_kernel, tb=tb, nx=nx, ny=ny)
    blk = pl.BlockSpec((tb, nx, ny), lambda i: (i, 0, 0))
    mat_x = pl.BlockSpec((nx, nx), lambda i: (0, 0))
    mat_y = pl.BlockSpec((ny, ny), lambda i: (0, 0))

    kr, ki = pl.pallas_call(
        kernel,
        out_shape=(jax.ShapeDtypeStruct((c_pad, nx, ny), jnp.float32),
                   jax.ShapeDtypeStruct((c_pad, nx, ny), jnp.float32)),
        grid=(c_pad // tb,),
        in_specs=[blk, blk, mat_y, mat_y, mat_x, mat_x],
        out_specs=(blk, blk),
        compiler_params=pltpu.CompilerParams(
            dimension_semantics=("parallel",)),
    )(xr, xi, dytr, dyti, dxtr, dxti)

    out = jnp.stack((kr[:c], ki[:c]), axis=-1).reshape(lead_shape + (nx, ny, 2))
    return jnp.transpose(out, inv_perm)


# ---------------------------------------------------------------------------
# Module wrapper (mirrors the PyTorch SenseModel_single).
# ---------------------------------------------------------------------------
class SenseModel_single:
    """Pallas TPU port of SenseModel_single (forward/adjoint SENSE ops)."""

    def __init__(self, coord=None, weights=None, block_channels=8):
        del coord
        self.weights = 1.0 if weights is None else weights
        self.block_channels = block_channels

    def _is_scalar_weight(self):
        if isinstance(self.weights, (int, float)):
            return True
        return getattr(self.weights, "ndim", None) == 0

    def _forward_op(self, image):
        if self._is_scalar_weight():
            return _centered_fft2_pallas(
                image, inverse=False, scale=float(self.weights),
                block_channels=self.block_channels)
        kspace = _centered_fft2_pallas(
            image, inverse=False, block_channels=self.block_channels)
        return self.weights * kspace          # broadcast k-space weighting (glue)

    def _adjoint_op(self, kspace):
        if self._is_scalar_weight():
            return _centered_fft2_pallas(
                kspace, inverse=True, scale=float(self.weights),
                block_channels=self.block_channels)
        return _centered_fft2_pallas(
            self.weights * kspace, inverse=True,
            block_channels=self.block_channels)

    def __call__(self, input, adjoint=False):
        if adjoint:
            return self._adjoint_op(input)
        return self._forward_op(input)


# ---------------------------------------------------------------------------
# Pure-JAX reference replicating the PyTorch fft2 / ifft2 for validation.
# ---------------------------------------------------------------------------
def _fft2_reference(data, inverse=False):
    nd = data.ndim
    perm = (0, 3, 1, 2, 4) if nd == 5 else (0, 3, 4, 1, 2, 5)
    inv_perm = tuple(int(i) for i in np.argsort(perm))
    x = jnp.transpose(data.astype(jnp.float32), perm)
    xc = x[..., 0] + 1j * x[..., 1]
    xc = jnp.fft.ifftshift(xc, axes=(-2, -1))
    if inverse:
        xc = jnp.fft.ifftn(xc, axes=(-2, -1), norm="ortho")
    else:
        xc = jnp.fft.fftn(xc, axes=(-2, -1), norm="ortho")
    xc = jnp.fft.fftshift(xc, axes=(-2, -1))
    out = jnp.stack((jnp.real(xc), jnp.imag(xc)), axis=-1)
    return jnp.transpose(out, inv_perm)


if __name__ == "__main__":
    key = jax.random.PRNGKey(0)
    k5, k6 = jax.random.split(key)

    model = SenseModel_single(block_channels=4)   # tb=4 -> grid>1 + padded tail

    # 5-D input [batch, x, y, echo, 2]
    x5 = jax.random.normal(k5, (2, 16, 16, 3, 2), dtype=jnp.float32)
    out5 = jax.block_until_ready(model(x5, adjoint=False))      # forward
    assert out5.shape == x5.shape, out5.shape
    err = float(jnp.max(jnp.abs(out5 - _fft2_reference(x5, inverse=False))))
    assert err < 1e-3, f"forward (5-D) max abs error {err}"

    # adjoint path (ifft2)
    img5 = jax.block_until_ready(model(out5, adjoint=True))
    err = float(jnp.max(jnp.abs(img5 - _fft2_reference(out5, inverse=True))))
    assert err < 1e-3, f"adjoint (5-D) max abs error {err}"

    # 6-D input [batch, x, y, t, echo, 2]
    x6 = jax.random.normal(k6, (1, 16, 16, 2, 3, 2), dtype=jnp.float32)
    out6 = jax.block_until_ready(model(x6, adjoint=False))
    assert out6.shape == x6.shape, out6.shape
    err = float(jnp.max(jnp.abs(out6 - _fft2_reference(x6, inverse=False))))
    assert err < 1e-3, f"forward (6-D) max abs error {err}"

    print("KERNEL_OK")
</pallas_src>

<mosaic_0001>
module attributes {stable_mosaic.version = 11 : i64} {
  func.func @_cdft2_kernel(%arg0: i32, %arg1: memref<4x16x16xf32, #tpu.memory_space<vmem>>, %arg2: memref<4x16x16xf32, #tpu.memory_space<vmem>>, %arg3: memref<16x16xf32, #tpu.memory_space<vmem>>, %arg4: memref<16x16xf32, #tpu.memory_space<vmem>>, %arg5: memref<16x16xf32, #tpu.memory_space<vmem>>, %arg6: memref<16x16xf32, #tpu.memory_space<vmem>>, %arg7: memref<4x16x16xf32, #tpu.memory_space<vmem>>, %arg8: memref<4x16x16xf32, #tpu.memory_space<vmem>>) attributes {dimension_semantics = [#tpu.dimension_semantics<parallel>], iteration_bounds = array<i64: 2>, scalar_prefetch = 0 : i64, scratch_operands = 0 : i64, tpu.core_type = #tpu.core_type<tc>, window_params = [{transform_indices = @transform_0, window_bounds = array<i64: 4, 16, 16>}, {transform_indices = @transform_1, window_bounds = array<i64: 4, 16, 16>}, {pipeline_mode = #tpu.pipeline_mode<synchronous>, transform_indices = @transform_2, window_bounds = array<i64: 16, 16>}, {pipeline_mode = #tpu.pipeline_mode<synchronous>, transform_indices = @transform_3, window_bounds = array<i64: 16, 16>}, {pipeline_mode = #tpu.pipeline_mode<synchronous>, transform_indices = @transform_4, window_bounds = array<i64: 16, 16>}, {pipeline_mode = #tpu.pipeline_mode<synchronous>, transform_indices = @transform_5, window_bounds = array<i64: 16, 16>}, {transform_indices = @transform_6, window_bounds = array<i64: 4, 16, 16>}, {transform_indices = @transform_7, window_bounds = array<i64: 4, 16, 16>}]} {
    %c0 = arith.constant 0 : index
    %c0_0 = arith.constant 0 : index
    %c0_1 = arith.constant 0 : index
    %0 = vector.load %arg1[%c0, %c0_0, %c0_1] : memref<4x16x16xf32, #tpu.memory_space<vmem>>, vector<4x16x16xf32>
    %1 = vector.shape_cast %0 : vector<4x16x16xf32> to vector<64x16xf32>
    %c0_2 = arith.constant 0 : index
    %c0_3 = arith.constant 0 : index
    %c0_4 = arith.constant 0 : index
    %2 = vector.load %arg2[%c0_2, %c0_3, %c0_4] : memref<4x16x16xf32, #tpu.memory_space<vmem>>, vector<4x16x16xf32>
    %3 = vector.shape_cast %2 : vector<4x16x16xf32> to vector<64x16xf32>
    %c0_5 = arith.constant 0 : index
    %c0_6 = arith.constant 0 : index
    %4 = vector.load %arg3[%c0_5, %c0_6] : memref<16x16xf32, #tpu.memory_space<vmem>>, vector<16x16xf32>
    %c0_7 = arith.constant 0 : index
    %c0_8 = arith.constant 0 : index
    %5 = vector.load %arg4[%c0_7, %c0_8] : memref<16x16xf32, #tpu.memory_space<vmem>>, vector<16x16xf32>
    %c0_9 = arith.constant 0 : index
    %c0_10 = arith.constant 0 : index
    %6 = vector.load %arg5[%c0_9, %c0_10] : memref<16x16xf32, #tpu.memory_space<vmem>>, vector<16x16xf32>
    %c0_11 = arith.constant 0 : index
    %c0_12 = arith.constant 0 : index
    %7 = vector.load %arg6[%c0_11, %c0_12] : memref<16x16xf32, #tpu.memory_space<vmem>>, vector<16x16xf32>
    %cst = arith.constant dense<0.000000e+00> : vector<64x16xf32>
    %8 = tpu.matmul %1, %4, %cst {dimension_numbers = #tpu.dot_dimension_numbers<[1], [0], [0], [1], [0, 0, 1, 1], [], []>} : vector<64x16xf32>, vector<16x16xf32>, vector<64x16xf32> -> vector<64x16xf32>
    %cst_13 = arith.constant dense<0.000000e+00> : vector<64x16xf32>
    %9 = tpu.matmul %3, %5, %cst_13 {dimension_numbers = #tpu.dot_dimension_numbers<[1], [0], [0], [1], [0, 0, 1, 1], [], []>} : vector<64x16xf32>, vector<16x16xf32>, vector<64x16xf32> -> vector<64x16xf32>
    %10 = arith.subf %8, %9 : vector<64x16xf32>
    %cst_14 = arith.constant dense<0.000000e+00> : vector<64x16xf32>
    %11 = tpu.matmul %1, %5, %cst_14 {dimension_numbers = #tpu.dot_dimension_numbers<[1], [0], [0], [1], [0, 0, 1, 1], [], []>} : vector<64x16xf32>, vector<16x16xf32>, vector<64x16xf32> -> vector<64x16xf32>
    %cst_15 = arith.constant dense<0.000000e+00> : vector<64x16xf32>
    %12 = tpu.matmul %3, %4, %cst_15 {dimension_numbers = #tpu.dot_dimension_numbers<[1], [0], [0], [1], [0, 0, 1, 1], [], []>} : vector<64x16xf32>, vector<16x16xf32>, vector<64x16xf32> -> vector<64x16xf32>
    %13 = arith.addf %11, %12 : vector<64x16xf32>
    %14 = vector.shape_cast %10 : vector<64x16xf32> to vector<4x16x16xf32>
    %15 = tpu.transpose %14, [0, 2, 1] : vector<4x16x16xf32> -> vector<4x16x16xf32>
    %16 = vector.shape_cast %15 : vector<4x16x16xf32> to vector<64x16xf32>
    %17 = vector.shape_cast %13 : vector<64x16xf32> to vector<4x16x16xf32>
    %18 = tpu.transpose %17, [0, 2, 1] : vector<4x16x16xf32> -> vector<4x16x16xf32>
    %19 = vector.shape_cast %18 : vector<4x16x16xf32> to vector<64x16xf32>
    %cst_16 = arith.constant dense<0.000000e+00> : vector<64x16xf32>
    %20 = tpu.matmul %16, %6, %cst_16 {dimension_numbers = #tpu.dot_dimension_numbers<[1], [0], [0], [1], [0, 0, 1, 1], [], []>} : vector<64x16xf32>, vector<16x16xf32>, vector<64x16xf32> -> vector<64x16xf32>
    %cst_17 = arith.constant dense<0.000000e+00> : vector<64x16xf32>
    %21 = tpu.matmul %19, %7, %cst_17 {dimension_numbers = #tpu.dot_dimension_numbers<[1], [0], [0], [1], [0, 0, 1, 1], [], []>} : vector<64x16xf32>, vector<16x16xf32>, vector<64x16xf32> -> vector<64x16xf32>
    %22 = arith.subf %20, %21 : vector<64x16xf32>
    %cst_18 = arith.constant dense<0.000000e+00> : vector<64x16xf32>
    %23 = tpu.matmul %16, %7, %cst_18 {dimension_numbers = #tpu.dot_dimension_numbers<[1], [0], [0], [1], [0, 0, 1, 1], [], []>} : vector<64x16xf32>, vector<16x16xf32>, vector<64x16xf32> -> vector<64x16xf32>
    %cst_19 = arith.constant dense<0.000000e+00> : vector<64x16xf32>
    %24 = tpu.matmul %19, %6, %cst_19 {dimension_numbers = #tpu.dot_dimension_numbers<[1], [0], [0], [1], [0, 0, 1, 1], [], []>} : vector<64x16xf32>, vector<16x16xf32>, vector<64x16xf32> -> vector<64x16xf32>
    %25 = arith.addf %23, %24 : vector<64x16xf32>
    %26 = vector.shape_cast %22 : vector<64x16xf32> to vector<4x16x16xf32>
    %27 = tpu.transpose %26, [0, 2, 1] : vector<4x16x16xf32> -> vector<4x16x16xf32>
    %c0_20 = arith.constant 0 : index
    %c0_21 = arith.constant 0 : index
    %c0_22 = arith.constant 0 : index
    %28 = vector.load %arg7[%c0_20, %c0_21, %c0_22] : memref<4x16x16xf32, #tpu.memory_space<vmem>>, vector<4x16x16xf32>
    tpu.vector_store %arg7[%c0_20, %c0_21, %c0_22], %27 {strides = array<i32>} : memref<4x16x16xf32, #tpu.memory_space<vmem>>, vector<4x16x16xf32>,
    %29 = vector.shape_cast %25 : vector<64x16xf32> to vector<4x16x16xf32>
    %30 = tpu.transpose %29, [0, 2, 1] : vector<4x16x16xf32> -> vector<4x16x16xf32>
    %c0_23 = arith.constant 0 : index
    %c0_24 = arith.constant 0 : index
    %c0_25 = arith.constant 0 : index
    %31 = vector.load %arg8[%c0_23, %c0_24, %c0_25] : memref<4x16x16xf32, #tpu.memory_space<vmem>>, vector<4x16x16xf32>
    tpu.vector_store %arg8[%c0_23, %c0_24, %c0_25], %30 {strides = array<i32>} : memref<4x16x16xf32, #tpu.memory_space<vmem>>, vector<4x16x16xf32>,
    return
  }
  func.func @transform_0(%arg0: i32) -> (i32, i32, i32) {
    %c0_i32 = arith.constant 0 : i32
    %c0_i32_0 = arith.constant 0 : i32
    %c0_i32_1 = arith.constant 0 : i32
    return %arg0, %c0_i32, %c0_i32_0 : i32, i32, i32
  }
  func.func @transform_1(%arg0: i32) -> (i32, i32, i32) {
    %c0_i32 = arith.constant 0 : i32
    %c0_i32_0 = arith.constant 0 : i32
    %c0_i32_1 = arith.constant 0 : i32
    return %arg0, %c0_i32, %c0_i32_0 : i32, i32, i32
  }
  func.func @transform_2(%arg0: i32) -> (i32, i32) {
    %c0_i32 = arith.constant 0 : i32
    %c0_i32_0 = arith.constant 0 : i32
    %c0_i32_1 = arith.constant 0 : i32
    return %c0_i32, %c0_i32_0 : i32, i32
  }
  func.func @transform_3(%arg0: i32) -> (i32, i32) {
    %c0_i32 = arith.constant 0 : i32
    %c0_i32_0 = arith.constant 0 : i32
    %c0_i32_1 = arith.constant 0 : i32
    return %c0_i32, %c0_i32_0 : i32, i32
  }
  func.func @transform_4(%arg0: i32) -> (i32, i32) {
    %c0_i32 = arith.constant 0 : i32
    %c0_i32_0 = arith.constant 0 : i32
    %c0_i32_1 = arith.constant 0 : i32
    return %c0_i32, %c0_i32_0 : i32, i32
  }
  func.func @transform_5(%arg0: i32) -> (i32, i32) {
    %c0_i32 = arith.constant 0 : i32
    %c0_i32_0 = arith.constant 0 : i32
    %c0_i32_1 = arith.constant 0 : i32
    return %c0_i32, %c0_i32_0 : i32, i32
  }
  func.func @transform_6(%arg0: i32) -> (i32, i32, i32) {
    %c0_i32 = arith.constant 0 : i32
    %c0_i32_0 = arith.constant 0 : i32
    %c0_i32_1 = arith.constant 0 : i32
    return %arg0, %c0_i32, %c0_i32_0 : i32, i32, i32
  }
  func.func @transform_7(%arg0: i32) -> (i32, i32, i32) {
    %c0_i32 = arith.constant 0 : i32
    %c0_i32_0 = arith.constant 0 : i32
    %c0_i32_1 = arith.constant 0 : i32
    return %arg0, %c0_i32, %c0_i32_0 : i32, i32, i32
  }
}

</mosaic_0001>

<llo_original>
// kernel: tpu_custom_call.1
$region0: #{tpu_custom_call.1}
  #allocation0 [shape = 'u32[]', space=smem, size = 0x4, offset = 0x4, fixed_abs, tag = 'smem constant byte address 0x4 - core index']
  #allocation1 [shape = 'u32[144,128]{1,0:T(1,128)}', space=vmem, size = 0x12000, scoped, tag = 'internal scratch']
  %s0 = inlined_call_operand.hbm [shape: f32[8,16,16], index: 0, kind: input, shape index: {}]
  %s1 = inlined_call_operand.hbm [shape: f32[8,16,16], index: 1, kind: input, shape index: {}]
  %s2 = inlined_call_operand.hbm [shape: f32[16,16], index: 2, kind: input, shape index: {}]
  %s3 = inlined_call_operand.hbm [shape: f32[16,16], index: 3, kind: input, shape index: {}]
  %s4 = inlined_call_operand.hbm [shape: f32[16,16], index: 4, kind: input, shape index: {}]
  %s5 = inlined_call_operand.vmem [shape: f32[16,16], index: 5, kind: input, shape index: {}]
  %s6 = inlined_call_operand.hbm [shape: f32[8,16,16], index: 6, kind: output, shape index: {0}]
  %s7 = inlined_call_operand.hbm [shape: f32[8,16,16], index: 7, kind: output, shape index: {1}]
  %8 = xla_tuple %s6, %s7
  %s9 = sld [smem:[#allocation0]]
  $region85: #{tpu_custom_call.1} parent=0
    _
  %s11 = ssub.s32 1, %s9
  %s12 = scalar_select 0, %s11, %s9
  $region1: #{tpu_custom_call.1} parent=0
    #allocation2 [shape = 'u8[65536]{0}', space=vmem, size = 0x10000, scoped, tag = 'input window, operand 0']
    #allocation3 [shape = 's32[2]{0}', space=sflag, size = 0x8, scoped, tag = 'scoped memory for tpu_custom_call.1']
    #allocation4 [shape = 's32[2]{0}', space=sflag, size = 0x8, scoped, tag = 'scoped memory for tpu_custom_call.1']
    #allocation5 [shape = 'u8[65536]{0}', space=vmem, size = 0x10000, scoped, tag = 'input window, operand 1']
    #allocation6 [shape = 's32[2]{0}', space=sflag, size = 0x8, scoped, tag = 'scoped memory for tpu_custom_call.1']
    #allocation7 [shape = 'u8[8192]{0}', space=vmem, size = 0x2000, scoped, tag = 'input window, operand 2, single buffered']
    #allocation8 [shape = 'u8[8192]{0}', space=vmem, size = 0x2000, scoped, tag = 'input window, operand 3, single buffered']
    #allocation9 [shape = 's32[1]{0}', space=sflag, size = 0x4, scoped, tag = 'scoped memory for tpu_custom_call.1']
    #allocation10 [shape = 'u8[8192]{0}', space=vmem, size = 0x2000, scoped, tag = 'input window, operand 4, single buffered']
    #allocation11 [shape = 'u8[65536]{0}', space=vmem, size = 0x10000, scoped, tag = 'output window, operand 0']
    #allocation12 [shape = 'u8[65536]{0}', space=vmem, size = 0x10000, scoped, tag = 'output window, operand 1']
    #allocation13 [shape = 's32[2]{0}', space=sflag, size = 0x8, scoped, tag = 'scoped memory for tpu_custom_call.1']
    %13 = vsyncpa [#allocation3], 0
    %s14 = scalar_lea.sflag [#allocation3], 1
    %15 = vsyncpa %s14, 0
    %16 = vsyncpa [#allocation6], 0
    %s17 = scalar_lea.sflag [#allocation6], 1
    %18 = vsyncpa %s17, 0
    %19 = vsyncpa [#allocation9], 0
    %20 = vsyncpa [#allocation4], 0
    %s21 = scalar_lea.sflag [#allocation4], 1
    %22 = vsyncpa %s21, 0
    %23 = vsyncpa [#allocation13], 0
    %s24 = scalar_lea.sflag [#allocation13], 1
    %25 = vsyncpa %s24, 0
    loop: start=0, step=1, limit=4
    $region2: #{tpu_custom_call.1} parent=1 // loop_pre_header
      _
    $region3: #{tpu_custom_call.1} parent=1 // loop_header
      %s27 = sphi 0, %s31
      %p28 = scmp.ge.s32.totalorder %s27, 4
      %s37 = sphi 0, %s39
      %s40 = sphi 0, %s37
      %s41 = sphi 0, %s40
      %s57 = sphi 0, %s41
      %s63 = sphi 0, %s65
      %s66 = sphi 0, %s63
      %s67 = sphi 0, %s66
      %s83 = sphi 0, %s67
      %s87 = sphi 0, %s87
      %s89 = sphi 0, %s87
      %s90 = sphi 0, %s89
      %s104 = sphi 0, %s90
      %s108 = sphi 0, %s108
      %s110 = sphi 0, %s108
      %s111 = sphi 0, %s110
      %s125 = sphi 0, %s111
      %s129 = sphi 0, %s129
      %s131 = sphi 0, %s129
      %s132 = sphi 0, %s131
      %s146 = sphi 0, %s132
      %s150 = sphi 0, %s150
      %s152 = sphi 0, %s150
      %s153 = sphi 0, %s152
      %s167 = sphi 0, %s153
      %s173 = sphi 0, %s175
      %s176 = sphi 0, %s173
      %s177 = sphi 0, %s176
      %s193 = sphi 0, %s177
      %s199 = sphi 0, %s201
      %s202 = sphi 0, %s199
      %s203 = sphi 0, %s202
      %s219 = sphi 0, %s203
    $region4: #{tpu_custom_call.1} parent=1 // loop_header_branch
      %30 = sbr.rel (%p28) target = $region8
    $region5: #{tpu_custom_call.1} parent=1 // loop_body
      %s32 = ssub.s32 %s27, 1
      %s33 = ssub.s32 %s27, 2
      %s34 = sadd.s32 %s27, 1
      %s35 = ssub.s32 %s27, %s34
      %p36 = scmp.eq.s32.totalorder %s35, 0
      %s38 = sadd.s32 %s37, 1
      %s39 = scalar_select %p36, %s37, %s38
      %p42 = pneg %p36
      %p43 = scmp.eq.s32.totalorder %s27, 1
      %p44 = por %p42, %p43
      %p45 = scmp.ne.s32.totalorder %s37, %s40
      %p46 = scmp.eq.s32.totalorder %s27, 0
      %p47 = por %p45, %p46
      %p48 = scmp.ne.s32.totalorder %s37, %s40
      %p49 = scmp.eq.s32.totalorder %s32, 1
      %p50 = por %p48, %p49
      %p51 = scmp.ne.s32.totalorder %s40, %s41
      %p52 = scmp.eq.s32.totalorder %s32, 0
      %p53 = por %p51, %p52
      %p54 = scmp.ne.s32.totalorder %s40, %s41
      %p55 = scmp.eq.s32.totalorder %s33, 1
      %p56 = por %p54, %p55
      %p58 = scmp.ne.s32.totalorder %s41, %s57
      %p59 = scmp.eq.s32.totalorder %s33, 0
      %p60 = por %p58, %p59
      %s61 = ssub.s32 %s27, %s34
      %p62 = scmp.eq.s32.totalorder %s61, 0
      %s64 = sadd.s32 %s63, 1
      %s65 = scalar_select %p62, %s63, %s64
      %p68 = pneg %p62
      %p69 = scmp.eq.s32.totalorder %s27, 1
      %p70 = por %p68, %p69
      %p71 = scmp.ne.s32.totalorder %s63, %s66
      %p72 = scmp.eq.s32.totalorder %s27, 0
      %p73 = por %p71, %p72
      %p74 = scmp.ne.s32.totalorder %s63, %s66
      %p75 = scmp.eq.s32.totalorder %s32, 1
      %p76 = por %p74, %p75
      %p77 = scmp.ne.s32.totalorder %s66, %s67
      %p78 = scmp.eq.s32.totalorder %s32, 0
      %p79 = por %p77, %p78
      %p80 = scmp.ne.s32.totalorder %s66, %s67
      %p81 = scmp.eq.s32.totalorder %s33, 1
      %p82 = por %p80, %p81
      %p84 = scmp.ne.s32.totalorder %s67, %s83
      %p85 = scmp.eq.s32.totalorder %s33, 0
      %p86 = por %p84, %p85
      %s88 = sadd.s32 %s87, 1
      %p91 = scmp.eq.s32.totalorder %s27, 1
      %p92 = scmp.ne.s32.totalorder %s87, %s89
      %p93 = scmp.eq.s32.totalorder %s27, 0
      %p94 = por %p92, %p93
      %p95 = scmp.ne.s32.totalorder %s87, %s89
      %p96 = scmp.eq.s32.totalorder %s32, 1
      %p97 = por %p95, %p96
      %p98 = scmp.ne.s32.totalorder %s89, %s90
      %p99 = scmp.eq.s32.totalorder %s32, 0
      %p100 = por %p98, %p99
      %p101 = scmp.ne.s32.totalorder %s89, %s90
      %p102 = scmp.eq.s32.totalorder %s33, 1
      %p103 = por %p101, %p102
      %p105 = scmp.ne.s32.totalorder %s90, %s104
      %p106 = scmp.eq.s32.totalorder %s33, 0
      %p107 = por %p105, %p106
      %s109 = sadd.s32 %s108, 1
      %p112 = scmp.eq.s32.totalorder %s27, 1
      %p113 = scmp.ne.s32.totalorder %s108, %s110
      %p114 = scmp.eq.s32.totalorder %s27, 0
      %p115 = por %p113, %p114
      %p116 = scmp.ne.s32.totalorder %s108, %s110
      %p117 = scmp.eq.s32.totalorder %s32, 1
      %p118 = por %p116, %p117
      %p119 = scmp.ne.s32.totalorder %s110, %s111
      %p120 = scmp.eq.s32.totalorder %s32, 0
      %p121 = por %p119, %p120
      %p122 = scmp.ne.s32.totalorder %s110, %s111
      %p123 = scmp.eq.s32.totalorder %s33, 1
      %p124 = por %p122, %p123
      %p126 = scmp.ne.s32.totalorder %s111, %s125
      %p127 = scmp.eq.s32.totalorder %s33, 0
      %p128 = por %p126, %p127
      %s130 = sadd.s32 %s129, 1
      %p133 = scmp.eq.s32.totalorder %s27, 1
      %p134 = scmp.ne.s32.totalorder %s129, %s131
      %p135 = scmp.eq.s32.totalorder %s27, 0
      %p136 = por %p134, %p135
      %p137 = scmp.ne.s32.totalorder %s129, %s131
      %p138 = scmp.eq.s32.totalorder %s32, 1
      %p139 = por %p137, %p138
      %p140 = scmp.ne.s32.totalorder %s131, %s132
      %p141 = scmp.eq.s32.totalorder %s32, 0
      %p142 = por %p140, %p141
      %p143 = scmp.ne.s32.totalorder %s131, %s132
      %p144 = scmp.eq.s32.totalorder %s33, 1
      %p145 = por %p143, %p144
      %p147 = scmp.ne.s32.totalorder %s132, %s146
      %p148 = scmp.eq.s32.totalorder %s33, 0
      %p149 = por %p147, %p148
      %s151 = sadd.s32 %s150, 1
      %p154 = scmp.eq.s32.totalorder %s27, 1
      %p155 = scmp.ne.s32.totalorder %s150, %s152
      %p156 = scmp.eq.s32.totalorder %s27, 0
      %p157 = por %p155, %p156
      %p158 = scmp.ne.s32.totalorder %s150, %s152
      %p159 = scmp.eq.s32.totalorder %s32, 1
      %p160 = por %p158, %p159
      %p161 = scmp.ne.s32.totalorder %s152, %s153
      %p162 = scmp.eq.s32.totalorder %s32, 0
      %p163 = por %p161, %p162
      %p164 = scmp.ne.s32.totalorder %s152, %s153
      %p165 = scmp.eq.s32.totalorder %s33, 1
      %p166 = por %p164, %p165
      %p168 = scmp.ne.s32.totalorder %s153, %s167
      %p169 = scmp.eq.s32.totalorder %s33, 0
      %p170 = por %p168, %p169
      %s171 = ssub.s32 %s27, %s34
      %p172 = scmp.eq.s32.totalorder %s171, 0
      %s174 = sadd.s32 %s173, 1
      %s175 = scalar_select %p172, %s173, %s174
      %p178 = pneg %p172
      %p179 = scmp.eq.s32.totalorder %s27, 1
      %p180 = por %p178, %p179
      %p181 = scmp.ne.s32.totalorder %s173, %s176
      %p182 = scmp.eq.s32.totalorder %s27, 0
      %p183 = por %p181, %p182
      %p184 = scmp.ne.s32.totalorder %s173, %s176
      %p185 = scmp.eq.s32.totalorder %s32, 1
      %p186 = por %p184, %p185
      %p187 = scmp.ne.s32.totalorder %s176, %s177
      %p188 = scmp.eq.s32.totalorder %s32, 0
      %p189 = por %p187, %p188
      %p190 = scmp.ne.s32.totalorder %s176, %s177
      %p191 = scmp.eq.s32.totalorder %s33, 1
      %p192 = por %p190, %p191
      %p194 = scmp.ne.s32.totalorder %s177, %s193
      %p195 = scmp.eq.s32.totalorder %s33, 0
      %p196 = por %p194, %p195
      %s197 = ssub.s32 %s27, %s34
      %p198 = scmp.eq.s32.totalorder %s197, 0
      %s200 = sadd.s32 %s199, 1
      %s201 = scalar_select %p198, %s199, %s200
      %p204 = pneg %p198
      %p205 = scmp.eq.s32.totalorder %s27, 1
      %p206 = por %p204, %p205
      %p207 = scmp.ne.s32.totalorder %s199, %s202
      %p208 = scmp.eq.s32.totalorder %s27, 0
      %p209 = por %p207, %p208
      %p210 = scmp.ne.s32.totalorder %s199, %s202
      %p211 = scmp.eq.s32.totalorder %s32, 1
      %p212 = por %p210, %p211
      %p213 = scmp.ne.s32.totalorder %s202, %s203
      %p214 = scmp.eq.s32.totalorder %s32, 0
      %p215 = por %p213, %p214
      %p216 = scmp.ne.s32.totalorder %s202, %s203
      %p217 = scmp.eq.s32.totalorder %s33, 1
      %p218 = por %p216, %p217
      %p220 = scmp.ne.s32.totalorder %s203, %s219
      %p221 = scmp.eq.s32.totalorder %s33, 0
      %p222 = por %p220, %p221
      %p223 = scmp.le.s32.totalorder 1, %s27
      %p224 = scmp.lt.s32.totalorder %s27, 3
      %p225 = pnand %p223, %p224
      %p226 = pneg %p225
      // Predicated region
      $region9: #{tpu_custom_call.1} parent=5 // pred_check
        _
      $region10: #{tpu_custom_call.1} parent=5 // pred_check_branch
        %228 = sbr.rel (%p225) target = $region12
      $region11: #{tpu_custom_call.1} parent=5 // pred_region
        %s229 = ssub.s32 %s27, 1
        // Predicated region
        $region13: #{tpu_custom_call.1} parent=11 // pred_check
          %p230 = pneg %p100
        $region14: #{tpu_custom_call.1} parent=11 // pred_check_branch
          %232 = sbr.rel (%p230) target = $region16
        $region15: #{tpu_custom_call.1} parent=11 // pred_region
          %s234 = ssub.s32 256, 256
          %235 = vsyncadd [#allocation6], %s234
          %s236 = sshll.u32 [#allocation7], 4
          %s237 = int_to_ptr.vmem [resolvable:$true] %s236
          %242 = dma.hbm_to_vmem [thread:$0]  %s2, 256, %s237, [#allocation6], 128, 128, 8
        $region16: #{tpu_custom_call.1} parent=11 // pred_fallthru
          _
        // Predicated region
        $region17: #{tpu_custom_call.1} parent=11 // pred_check
          %p243 = pneg %p121
        $region18: #{tpu_custom_call.1} parent=11 // pred_check_branch
          %245 = sbr.rel (%p243) target = $region20
        $region19: #{tpu_custom_call.1} parent=11 // pred_region
          %s247 = ssub.s32 256, 256
          %248 = vsyncadd [#allocation9], %s247
          %s249 = sshll.u32 [#allocation8], 4
          %s250 = int_to_ptr.vmem [resolvable:$true] %s249
          %255 = dma.hbm_to_vmem [thread:$0]  %s3, 256, %s250, [#allocation9], 128, 128, 8
        $region20: #{tpu_custom_call.1} parent=11 // pred_fallthru
          _
        // Predicated region
        $region21: #{tpu_custom_call.1} parent=11 // pred_check
          %p256 = pneg %p142
        $region22: #{tpu_custom_call.1} parent=11 // pred_check_branch
          %258 = sbr.rel (%p256) target = $region24
        $region23: #{tpu_custom_call.1} parent=11 // pred_region
          %s260 = ssub.s32 256, 256
          %261 = vsyncadd [#allocation9], %s260
          %s262 = sshll.u32 [#allocation10], 4
          %s263 = int_to_ptr.vmem [resolvable:$true] %s262
          %268 = dma.hbm_to_vmem [thread:$0]  %s4, 256, %s263, [#allocation9], 128, 128, 8
        $region24: #{tpu_custom_call.1} parent=11 // pred_fallthru
          _
        // Predicated region
        $region25: #{tpu_custom_call.1} parent=11 // pred_check
          %p269 = pneg %p163
        $region26: #{tpu_custom_call.1} parent=11 // pred_check_branch
          %271 = sbr.rel (%p269) target = $region28
        $region27: #{tpu_custom_call.1} parent=11 // pred_region
          _
        $region28: #{tpu_custom_call.1} parent=11 // pred_fallthru
          _
      $region12: #{tpu_custom_call.1} parent=5 // pred_fallthru
        _
      %p272 = scmp.lt.s32.totalorder %s27, 2
      // Predicated region
      $region29: #{tpu_custom_call.1} parent=5 // pred_check
        %p273 = pneg %p272
      $region30: #{tpu_custom_call.1} parent=5 // pred_check_branch
        %275 = sbr.rel (%p273) target = $region32
      $region31: #{tpu_custom_call.1} parent=5 // pred_region
        // Predicated region
        $region33: #{tpu_custom_call.1} parent=31 // pred_check
          %p276 = pneg %p47
        $region34: #{tpu_custom_call.1} parent=31 // pred_check_branch
          %278 = sbr.rel (%p276) target = $region36
        $region35: #{tpu_custom_call.1} parent=31 // pred_region
          %s279 = sand.u32 %s37, 1
          %s280 = scalar_lea.sflag [#allocation3], %s279
          %s281 = sand.u32 %s37, 1
          %s282 = smul.addr %s281, 64
          %s283 = scalar_lea.vmem [#allocation2], %s282
          %s284 = smul.u32 4, %s27
          %s286 = ssub.s32 1024, 1024
          %287 = vsyncadd %s280, %s286
          %s288 = smul.addr %s284, 2
          %s289 = smul.addr %s288, 128
          %s290 = scalar_lea.hbm %s0, %s289
          %s291 = sshll.u32 %s283, 4
          %s292 = int_to_ptr.vmem [resolvable:$true] %s291
          %297 = dma.hbm_to_vmem [thread:$0]  %s290, 1024, %s292, %s280, 128, 128, 8
        $region36: #{tpu_custom_call.1} parent=31 // pred_fallthru
          _
        // Predicated region
        $region37: #{tpu_custom_call.1} parent=31 // pred_check
          %p298 = pneg %p73
        $region38: #{tpu_custom_call.1} parent=31 // pred_check_branch
          %300 = sbr.rel (%p298) target = $region40
        $region39: #{tpu_custom_call.1} parent=31 // pred_region
          %s301 = sand.u32 %s27, 1
          %s302 = scalar_lea.sflag [#allocation6], %s301
          %s303 = sand.u32 %s63, 1
          %s304 = smul.addr %s303, 64
          %s305 = scalar_lea.vmem [#allocation5], %s304
          %s306 = smul.u32 4, %s27
          %s308 = ssub.s32 1024, 1024
          %309 = vsyncadd %s302, %s308
          %s310 = smul.addr %s306, 2
          %s311 = smul.addr %s310, 128
          %s312 = scalar_lea.hbm %s1, %s311
          %s313 = sshll.u32 %s305, 4
          %s314 = int_to_ptr.vmem [resolvable:$true] %s313
          %319 = dma.hbm_to_vmem [thread:$0]  %s312, 1024, %s314, %s302, 128, 128, 8
        $region40: #{tpu_custom_call.1} parent=31 // pred_fallthru
          _
      $region32: #{tpu_custom_call.1} parent=5 // pred_fallthru
        _
      %p320 = scmp.le.s32.totalorder 1, %s27
      %p321 = scmp.lt.s32.totalorder %s27, 3
      %p322 = pnand %p320, %p321
      %p323 = pneg %p322
      // Predicated region
      $region41: #{tpu_custom_call.1} parent=5 // pred_check
        _
      $region42: #{tpu_custom_call.1} parent=5 // pred_check_branch
        %325 = sbr.rel (%p322) target = $region44
      $region43: #{tpu_custom_call.1} parent=5 // pred_region
        %s326 = ssub.s32 %s27, 1
        %s327 = sand.u32 %s40, 1
        %s328 = scalar_lea.sflag [#allocation3], %s327
        %s329 = sand.u32 %s40, 1
        %s330 = smul.addr %s329, 64
        %s331 = scalar_lea.vmem [#allocation2], %s330
        // Predicated region
        $region45: #{tpu_custom_call.1} parent=43 // pred_check
          %p332 = pneg %p53
        $region46: #{tpu_custom_call.1} parent=43 // pred_check_branch
          %334 = sbr.rel (%p332) target = $region48
        $region47: #{tpu_custom_call.1} parent=43 // pred_region
          %335 = dma.done %s328, 1024
        $region48: #{tpu_custom_call.1} parent=43 // pred_fallthru
          _
        %s336 = sand.u32 %s32, 1
        %s337 = scalar_lea.sflag [#allocation6], %s336
        %s338 = sand.u32 %s66, 1
        %s339 = smul.addr %s338, 64
        %s340 = scalar_lea.vmem [#allocation5], %s339
        // Predicated region
        $region49: #{tpu_custom_call.1} parent=43 // pred_check
          %p341 = pneg %p79
        $region50: #{tpu_custom_call.1} parent=43 // pred_check_branch
          %343 = sbr.rel (%p341) target = $region52
        $region51: #{tpu_custom_call.1} parent=43 // pred_region
          %344 = dma.done %s337, 1024
        $region52: #{tpu_custom_call.1} parent=43 // pred_fallthru
          _
        // Predicated region
        $region53: #{tpu_custom_call.1} parent=43 // pred_check
          %p345 = pneg %p100
        $region54: #{tpu_custom_call.1} parent=43 // pred_check_branch
          %347 = sbr.rel (%p345) target = $region56
        $region55: #{tpu_custom_call.1} parent=43 // pred_region
          %348 = dma.done [#allocation6], 256
        $region56: #{tpu_custom_call.1} parent=43 // pred_fallthru
          _
        // Predicated region
        $region57: #{tpu_custom_call.1} parent=43 // pred_check
          %p349 = pneg %p121
        $region58: #{tpu_custom_call.1} parent=43 // pred_check_branch
          %351 = sbr.rel (%p349) target = $region60
        $region59: #{tpu_custom_call.1} parent=43 // pred_region
          %352 = dma.done [#allocation9], 256
        $region60: #{tpu_custom_call.1} parent=43 // pred_fallthru
          _
        // Predicated region
        $region61: #{tpu_custom_call.1} parent=43 // pred_check
          %p353 = pneg %p142
        $region62: #{tpu_custom_call.1} parent=43 // pred_check_branch
          %355 = sbr.rel (%p353) target = $region64
        $region63: #{tpu_custom_call.1} parent=43 // pred_region
          %356 = dma.done [#allocation9], 256
        $region64: #{tpu_custom_call.1} parent=43 // pred_fallthru
          _
        %s357 = sand.u32 %s40, 1
        %s358 = scalar_lea.sflag [#allocation3], %s357
        %s359 = sand.u32 %s40, 1
        %s360 = smul.addr %s359, 64
        %s361 = scalar_lea.vmem [#allocation2], %s360
        %p362 = pneg %p53
        %p363 = pneg %p50
        %s364 = sand.u32 %s32, 1
        %s365 = scalar_lea.sflag [#allocation6], %s364
        %s366 = sand.u32 %s66, 1
        %s367 = smul.addr %s366, 64
        %s368 = scalar_lea.vmem [#allocation5], %s367
        %p369 = pneg %p79
        %p370 = pneg %p76
        %p371 = pneg %p100
        %p372 = pneg %p97
        %p373 = pneg %p121
        %p374 = pneg %p118
        %p375 = pneg %p142
        %p376 = pneg %p139
        %p377 = pneg %p163
        %p378 = pneg %p160
        %p379 = pneg %p189
        %p380 = pneg %p186
        %s381 = sand.u32 %s176, 1
        %s382 = scalar_lea.sflag [#allocation4], %s381
        %s383 = sand.u32 %s176, 1
        %s384 = smul.addr %s383, 64
        %s385 = scalar_lea.vmem [#allocation11], %s384
        %p386 = pneg %p215
        %p387 = pneg %p212
        %s388 = sand.u32 %s202, 1
        %s389 = scalar_lea.sflag [#allocation13], %s388
        %s390 = sand.u32 %s202, 1
        %s391 = smul.addr %s390, 64
        %s392 = scalar_lea.vmem [#allocation12], %s391
        %s393 = smul.u32 4, %s32
        %s394 = smul.u32 4, %s32
        %s395 = smul.u32 4, %s32
        %s396 = smul.u32 4, %s32
        %v397 = vld [vmem:[%s331] sm:$0xff]
        %v398 = vld [vmem:[%s331 + $0x8] sm:$0xff]
        %v399 = vld [vmem:[%s331 + $0x10] sm:$0xff]
        %v400 = vld [vmem:[%s331 + $0x18] sm:$0xff]
        %v401 = vld [vmem:[%s331 + $0x20] sm:$0xff]
        %v402 = vld [vmem:[%s331 + $0x28] sm:$0xff]
        %v403 = vld [vmem:[%s331 + $0x30] sm:$0xff]
        %v404 = vld [vmem:[%s331 + $0x38] sm:$0xff]
        %v405 = vld [vmem:[%s340] sm:$0xff]
        %v406 = vld [vmem:[%s340 + $0x8] sm:$0xff]
        %v407 = vld [vmem:[%s340 + $0x10] sm:$0xff]
        %v408 = vld [vmem:[%s340 + $0x18] sm:$0xff]
        %v409 = vld [vmem:[%s340 + $0x20] sm:$0xff]
        %v410 = vld [vmem:[%s340 + $0x28] sm:$0xff]
        %v411 = vld [vmem:[%s340 + $0x30] sm:$0xff]
        %v412 = vld [vmem:[%s340 + $0x38] sm:$0xff]
        %v413 = vld [vmem:[#allocation7] sm:$0xff]
        %v414 = vld [vmem:[#allocation7 + $0x8] sm:$0xff]
        %v415 = vld [vmem:[#allocation8] sm:$0xff]
        %v416 = vld [vmem:[#allocation8 + $0x8] sm:$0xff]
        %v417 = vld [vmem:[#allocation10] sm:$0xff]
        %v418 = vld [vmem:[#allocation10 + $0x8] sm:$0xff]
        %v419 = vld [vmem:[%s5] sm:$0xff]
        %v420 = vld [vmem:[%s5 + $0x8] sm:$0xff]
        %vm421 = vcmask 130048
        %v423 = vsel %vm421, %v397, 0
        %v426 = vsel %vm421, %v398, 0
        %v429 = vsel %vm421, %v399, 0
        %v432 = vsel %vm421, %v400, 0
        %v435 = vsel %vm421, %v401, 0
        %v438 = vsel %vm421, %v402, 0
        %v441 = vsel %vm421, %v403, 0
        %v444 = vsel %vm421, %v404, 0
        %446 = vmatprep.subr.mxu0 0.0
        %447 = vmatpush1.msra.mxu0 %v413
        %448 = vmatprep.subr.mxu0 0.0
        %449 = vmatpush1.msra.mxu0 %v414
        %450 = vmatprep.subr.mxu0 0.0
        %451 = vmatpush1.msra.mxu0 0.0
        %452 = vmatprep.subr.mxu0 0.0
        %453 = vmatpush1.msra.mxu0 0.0
        %454 = vmatprep.subr.mxu0 0.0
        %455 = vmatpush1.msra.mxu0 0.0
        %456 = vmatprep.subr.mxu0 0.0
        %457 = vmatpush1.msra.mxu0 0.0
        %458 = vmatprep.subr.mxu0 0.0
        %459 = vmatpush1.msra.mxu0 0.0
        %460 = vmatprep.subr.mxu0 0.0
        %461 = vmatpush1.msra.mxu0 0.0
        %462 = vmatprep.subr.mxu0 0.0
        %463 = vmatpush1.msra.mxu0 0.0
        %464 = vmatprep.subr.mxu0 0.0
        %465 = vmatpush1.msra.mxu0 0.0
        %466 = vmatprep.subr.mxu0 0.0
        %467 = vmatpush1.msra.mxu0 0.0
        %468 = vmatprep.subr.mxu0 0.0
        %469 = vmatpush1.msra.mxu0 0.0
        %470 = vmatprep.subr.mxu0 0.0
        %471 = vmatpush1.msra.mxu0 0.0
        %472 = vmatprep.subr.mxu0 0.0
        %473 = vmatpush1.msra.mxu0 0.0
        %474 = vmatprep.subr.mxu0 0.0
        %475 = vmatpush1.msra.mxu0 0.0
        %476 = vmatprep.subr.mxu0 0.0
        %477 = vmatpush1.msra.mxu0 0.0
        %478 = vmatprep.subr.mxu0 0.0
        %479 = vmatpush1.msra.mxu0 0.0
        %480 = vmatprep.subr.mxu0 0.0
        %481 = vmatpush1.msra.mxu0 0.0
        %482 = vmatprep.subr.mxu0 0.0
        %483 = vmatpush1.msra.mxu0 0.0
        %484 = vmatprep.subr.mxu0 0.0
        %485 = vmatpush1.msra.mxu0 0.0
        %486 = vmatprep.subr.mxu0 0.0
        %487 = vmatpush1.msra.mxu0 0.0
        %488 = vmatprep.subr.mxu0 0.0
        %489 = vmatpush1.msra.mxu0 0.0
        %490 = vmatprep.subr.mxu0 0.0
        %491 = vmatpush1.msra.mxu0 0.0
        %492 = vmatprep.subr.mxu0 0.0
        %493 = vmatpush1.msra.mxu0 0.0
        %494 = vmatprep.subr.mxu0 0.0
        %495 = vmatpush1.msra.mxu0 0.0
        %496 = vmatprep.subr.mxu0 0.0
        %497 = vmatpush1.msra.mxu0 0.0
        %498 = vmatprep.subr.mxu0 0.0
        %499 = vmatpush1.msra.mxu0 0.0
        %500 = vmatprep.subr.mxu0 0.0
        %501 = vmatpush1.msra.mxu0 0.0
        %502 = vmatprep.subr.mxu0 0.0
        %503 = vmatpush1.msra.mxu0 0.0
        %504 = vmatprep.subr.mxu0 0.0
        %505 = vmatpush1.msra.mxu0 0.0
        %506 = vmatprep.subr.mxu0 0.0
        %507 = vmatpush1.msra.mxu0 0.0
        %508 = vmatprep.subr.mxu0 0.0
        %509 = vmatpush1.msra.mxu0 0.0
        %510 = vmatprep.mubr.f32.mxu0 0.0
        %511 = vmatmul.mubr.f32.gmra.mrb[0].mxu0 %v423
        %v512 = vpop.f32.mrb[0].mxu0
        %v513 = vadd.f32 0.0, %v512
        %v514 = vpop.f32.mrb[0].mxu0
        %515 = vmatprep.mubr.f32.mxu0 0.0
        %516 = vmatmul.mubr.f32.gmra.mrb[0].mxu0 %v426
        %v517 = vpop.f32.mrb[0].mxu0
        %v518 = vadd.f32 0.0, %v517
        %v519 = vpop.f32.mrb[0].mxu0
        %520 = vmatprep.mubr.f32.mxu0 0.0
        %521 = vmatmul.mubr.f32.gmra.mrb[0].mxu0 %v429
        %v522 = vpop.f32.mrb[0].mxu0
        %v523 = vadd.f32 0.0, %v522
        %v524 = vpop.f32.mrb[0].mxu0
        %525 = vmatprep.mubr.f32.mxu0 0.0
        %526 = vmatmul.mubr.f32.gmra.mrb[0].mxu0 %v432
        %v527 = vpop.f32.mrb[0].mxu0
        %v528 = vadd.f32 0.0, %v527
        %v529 = vpop.f32.mrb[0].mxu0
        %530 = vmatprep.mubr.f32.mxu0 0.0
        %531 = vmatmul.mubr.f32.gmra.mrb[0].mxu0 %v435
        %v532 = vpop.f32.mrb[0].mxu0
        %v533 = vadd.f32 0.0, %v532
        %v534 = vpop.f32.mrb[0].mxu0
        %535 = vmatprep.mubr.f32.mxu0 0.0
        %536 = vmatmul.mubr.f32.gmra.mrb[0].mxu0 %v438
        %v537 = vpop.f32.mrb[0].mxu0
        %v538 = vadd.f32 0.0, %v537
        %v539 = vpop.f32.mrb[0].mxu0
        %540 = vmatprep.mubr.f32.mxu0 0.0
        %541 = vmatmul.mubr.f32.gmra.mrb[0].mxu0 %v441
        %v542 = vpop.f32.mrb[0].mxu0
        %v543 = vadd.f32 0.0, %v542
        %v544 = vpop.f32.mrb[0].mxu0
        %545 = vmatprep.mubr.f32.mxu0 0.0
        %546 = vmatmul.mubr.f32.gmra.mrb[0].mxu0 %v444
        %v547 = vpop.f32.mrb[0].mxu0
        %v548 = vadd.f32 0.0, %v547
        %v549 = vpop.f32.mrb[0].mxu0
        %550 = vdwg.mxu0
        %v552 = vsel %vm421, %v405, 0
        %v555 = vsel %vm421, %v406, 0
        %v558 = vsel %vm421, %v407, 0
        %v561 = vsel %vm421, %v408, 0
        %v564 = vsel %vm421, %v409, 0
        %v567 = vsel %vm421, %v410, 0
        %v570 = vsel %vm421, %v411, 0
        %v573 = vsel %vm421, %v412, 0
        %575 = vmatprep.subr.mxu0 0.0
        %576 = vmatpush1.msra.mxu0 %v415
        %577 = vmatprep.subr.mxu0 0.0
        %578 = vmatpush1.msra.mxu0 %v416
        %579 = vmatprep.subr.mxu0 0.0
        %580 = vmatpush1.msra.mxu0 0.0
        %581 = vmatprep.subr.mxu0 0.0
        %582 = vmatpush1.msra.mxu0 0.0
        %583 = vmatprep.subr.mxu0 0.0
        %584 = vmatpush1.msra.mxu0 0.0
        %585 = vmatprep.subr.mxu0 0.0
        %586 = vmatpush1.msra.mxu0 0.0
        %587 = vmatprep.subr.mxu0 0.0
        %588 = vmatpush1.msra.mxu0 0.0
        %589 = vmatprep.subr.mxu0 0.0
        %590 = vmatpush1.msra.mxu0 0.0
        %591 = vmatprep.subr.mxu0 0.0
        %592 = vmatpush1.msra.mxu0 0.0
        %593 = vmatprep.subr.mxu0 0.0
        %594 = vmatpush1.msra.mxu0 0.0
        %595 = vmatprep.subr.mxu0 0.0
        %596 = vmatpush1.msra.mxu0 0.0
        %597 = vmatprep.subr.mxu0 0.0
        %598 = vmatpush1.msra.mxu0 0.0
        %599 = vmatprep.subr.mxu0 0.0
        %600 = vmatpush1.msra.mxu0 0.0
        %601 = vmatprep.subr.mxu0 0.0
        %602 = vmatpush1.msra.mxu0 0.0
        %603 = vmatprep.subr.mxu0 0.0
        %604 = vmatpush1.msra.mxu0 0.0
        %605 = vmatprep.subr.mxu0 0.0
        %606 = vmatpush1.msra.mxu0 0.0
        %607 = vmatprep.subr.mxu0 0.0
        %608 = vmatpush1.msra.mxu0 0.0
        %609 = vmatprep.subr.mxu0 0.0
        %610 = vmatpush1.msra.mxu0 0.0
        %611 = vmatprep.subr.mxu0 0.0
        %612 = vmatpush1.msra.mxu0 0.0
        %613 = vmatprep.subr.mxu0 0.0
        %614 = vmatpush1.msra.mxu0 0.0
        %615 = vmatprep.subr.mxu0 0.0
        %616 = vmatpush1.msra.mxu0 0.0
        %617 = vmatprep.subr.mxu0 0.0
        %618 = vmatpush1.msra.mxu0 0.0
        %619 = vmatprep.subr.mxu0 0.0
        %620 = vmatpush1.msra.mxu0 0.0
        %621 = vmatprep.subr.mxu0 0.0
        %622 = vmatpush1.msra.mxu0 0.0
        %623 = vmatprep.subr.mxu0 0.0
        %624 = vmatpush1.msra.mxu0 0.0
        %625 = vmatprep.subr.mxu0 0.0
        %626 = vmatpush1.msra.mxu0 0.0
        %627 = vmatprep.subr.mxu0 0.0
        %628 = vmatpush1.msra.mxu0 0.0
        %629 = vmatprep.subr.mxu0 0.0
        %630 = vmatpush1.msra.mxu0 0.0
        %631 = vmatprep.subr.mxu0 0.0
        %632 = vmatpush1.msra.mxu0 0.0
        %633 = vmatprep.subr.mxu0 0.0
        %634 = vmatpush1.msra.mxu0 0.0
        %635 = vmatprep.subr.mxu0 0.0
        %636 = vmatpush1.msra.mxu0 0.0
        %637 = vmatprep.subr.mxu0 0.0
        %638 = vmatpush1.msra.mxu0 0.0
        %639 = vmatprep.mubr.f32.mxu0 0.0
        %640 = vmatmul.mubr.f32.gmra.mrb[0].mxu0 %v552
        %v641 = vpop.f32.mrb[0].mxu0
        %v642 = vadd.f32 0.0, %v641
        %v643 = vpop.f32.mrb[0].mxu0
        %644 = vmatprep.mubr.f32.mxu0 0.0
        %645 = vmatmul.mubr.f32.gmra.mrb[0].mxu0 %v555
        %v646 = vpop.f32.mrb[0].mxu0
        %v647 = vadd.f32 0.0, %v646
        %v648 = vpop.f32.mrb[0].mxu0
        %649 = vmatprep.mubr.f32.mxu0 0.0
        %650 = vmatmul.mubr.f32.gmra.mrb[0].mxu0 %v558
        %v651 = vpop.f32.mrb[0].mxu0
        %v652 = vadd.f32 0.0, %v651
        %v653 = vpop.f32.mrb[0].mxu0
        %654 = vmatprep.mubr.f32.mxu0 0.0
        %655 = vmatmul.mubr.f32.gmra.mrb[0].mxu0 %v561
        %v656 = vpop.f32.mrb[0].mxu0
        %v657 = vadd.f32 0.0, %v656
        %v658 = vpop.f32.mrb[0].mxu0
        %659 = vmatprep.mubr.f32.mxu0 0.0
        %660 = vmatmul.mubr.f32.gmra.mrb[0].mxu0 %v564
        %v661 = vpop.f32.mrb[0].mxu0
        %v662 = vadd.f32 0.0, %v661
        %v663 = vpop.f32.mrb[0].mxu0
        %664 = vmatprep.mubr.f32.mxu0 0.0
        %665 = vmatmul.mubr.f32.gmra.mrb[0].mxu0 %v567
        %v666 = vpop.f32.mrb[0].mxu0
        %v667 = vadd.f32 0.0, %v666
        %v668 = vpop.f32.mrb[0].mxu0
        %669 = vmatprep.mubr.f32.mxu0 0.0
        %670 = vmatmul.mubr.f32.gmra.mrb[0].mxu0 %v570
        %v671 = vpop.f32.mrb[0].mxu0
        %v672 = vadd.f32 0.0, %v671
        %v673 = vpop.f32.mrb[0].mxu0
        %674 = vmatprep.mubr.f32.mxu0 0.0
        %675 = vmatmul.mubr.f32.gmra.mrb[0].mxu0 %v573
        %v676 = vpop.f32.mrb[0].mxu0
        %v677 = vadd.f32 0.0, %v676
        %v678 = vpop.f32.mrb[0].mxu0
        %679 = vdwg.mxu0
        %v680 = vsub.f32 %v513, %v642
        %v681 = vsub.f32 %v518, %v647
        %v682 = vsub.f32 %v523, %v652
        %v683 = vsub.f32 %v528, %v657
        %v684 = vsub.f32 %v533, %v662
        %v685 = vsub.f32 %v538, %v667
        %v686 = vsub.f32 %v543, %v672
        %v687 = vsub.f32 %v548, %v677
        %688 = vmatprep.subr.mxu0 0.0
        %689 = vmatpush1.msra.mxu0 %v413
        %690 = vmatprep.subr.mxu0 0.0
        %691 = vmatpush1.msra.mxu0 %v414
        %692 = vmatprep.subr.mxu0 0.0
        %693 = vmatpush1.msra.mxu0 0.0
        %694 = vmatprep.subr.mxu0 0.0
        %695 = vmatpush1.msra.mxu0 0.0
        %696 = vmatprep.subr.mxu0 0.0
        %697 = vmatpush1.msra.mxu0 0.0
        %698 = vmatprep.subr.mxu0 0.0
        %699 = vmatpush1.msra.mxu0 0.0
        %700 = vmatprep.subr.mxu0 0.0
        %701 = vmatpush1.msra.mxu0 0.0
        %702 = vmatprep.subr.mxu0 0.0
        %703 = vmatpush1.msra.mxu0 0.0
        %704 = vmatprep.subr.mxu0 0.0
        %705 = vmatpush1.msra.mxu0 0.0
        %706 = vmatprep.subr.mxu0 0.0
        %707 = vmatpush1.msra.mxu0 0.0
        %708 = vmatprep.subr.mxu0 0.0
        %709 = vmatpush1.msra.mxu0 0.0
        %710 = vmatprep.subr.mxu0 0.0
        %711 = vmatpush1.msra.mxu0 0.0
        %712 = vmatprep.subr.mxu0 0.0
        %713 = vmatpush1.msra.mxu0 0.0
        %714 = vmatprep.subr.mxu0 0.0
        %715 = vmatpush1.msra.mxu0 0.0
        %716 = vmatprep.subr.mxu0 0.0
        %717 = vmatpush1.msra.mxu0 0.0
        %718 = vmatprep.subr.mxu0 0.0
        %719 = vmatpush1.msra.mxu0 0.0
        %720 = vmatprep.subr.mxu0 0.0
        %721 = vmatpush1.msra.mxu0 0.0
        %722 = vmatprep.subr.mxu0 0.0
        %723 = vmatpush1.msra.mxu0 0.0
        %724 = vmatprep.subr.mxu0 0.0
        %725 = vmatpush1.msra.mxu0 0.0
        %726 = vmatprep.subr.mxu0 0.0
        %727 = vmatpush1.msra.mxu0 0.0
        %728 = vmatprep.subr.mxu0 0.0
        %729 = vmatpush1.msra.mxu0 0.0
        %730 = vmatprep.subr.mxu0 0.0
        %731 = vmatpush1.msra.mxu0 0.0
        %732 = vmatprep.subr.mxu0 0.0
        %733 = vmatpush1.msra.mxu0 0.0
        %734 = vmatprep.subr.mxu0 0.0
        %735 = vmatpush1.msra.mxu0 0.0
        %736 = vmatprep.subr.mxu0 0.0
        %737 = vmatpush1.msra.mxu0 0.0
        %738 = vmatprep.subr.mxu0 0.0
        %739 = vmatpush1.msra.mxu0 0.0
        %740 = vmatprep.subr.mxu0 0.0
        %741 = vmatpush1.msra.mxu0 0.0
        %742 = vmatprep.subr.mxu0 0.0
        %743 = vmatpush1.msra.mxu0 0.0
        %744 = vmatprep.subr.mxu0 0.0
        %745 = vmatpush1.msra.mxu0 0.0
        %746 = vmatprep.subr.mxu0 0.0
        %747 = vmatpush1.msra.mxu0 0.0
        %748 = vmatprep.subr.mxu0 0.0
        %749 = vmatpush1.msra.mxu0 0.0
        %750 = vmatprep.subr.mxu0 0.0
        %751 = vmatpush1.msra.mxu0 0.0
        %752 = vmatprep.mubr.f32.mxu0 0.0
        %753 = vmatmul.mubr.f32.gmra.mrb[0].mxu0 %v552
        %v754 = vpop.f32.mrb[0].mxu0
        %v755 = vadd.f32 0.0, %v754
        %v756 = vpop.f32.mrb[0].mxu0
        %757 = vmatprep.mubr.f32.mxu0 0.0
        %758 = vmatmul.mubr.f32.gmra.mrb[0].mxu0 %v555
        %v759 = vpop.f32.mrb[0].mxu0
        %v760 = vadd.f32 0.0, %v759
        %v761 = vpop.f32.mrb[0].mxu0
        %762 = vmatprep.mubr.f32.mxu0 0.0
        %763 = vmatmul.mubr.f32.gmra.mrb[0].mxu0 %v558
        %v764 = vpop.f32.mrb[0].mxu0
        %v765 = vadd.f32 0.0, %v764
        %v766 = vpop.f32.mrb[0].mxu0
        %767 = vmatprep.mubr.f32.mxu0 0.0
        %768 = vmatmul.mubr.f32.gmra.mrb[0].mxu0 %v561
        %v769 = vpop.f32.mrb[0].mxu0
        %v770 = vadd.f32 0.0, %v769
        %v771 = vpop.f32.mrb[0].mxu0
        %772 = vmatprep.mubr.f32.mxu0 0.0
        %773 = vmatmul.mubr.f32.gmra.mrb[0].mxu0 %v564
        %v774 = vpop.f32.mrb[0].mxu0
        %v775 = vadd.f32 0.0, %v774
        %v776 = vpop.f32.mrb[0].mxu0
        %777 = vmatprep.mubr.f32.mxu0 0.0
        %778 = vmatmul.mubr.f32.gmra.mrb[0].mxu0 %v567
        %v779 = vpop.f32.mrb[0].mxu0
        %v780 = vadd.f32 0.0, %v779
        %v781 = vpop.f32.mrb[0].mxu0
        %782 = vmatprep.mubr.f32.mxu0 0.0
        %783 = vmatmul.mubr.f32.gmra.mrb[0].mxu0 %v570
        %v784 = vpop.f32.mrb[0].mxu0
        %v785 = vadd.f32 0.0, %v784
        %v786 = vpop.f32.mrb[0].mxu0
        %787 = vmatprep.mubr.f32.mxu0 0.0
        %788 = vmatmul.mubr.f32.gmra.mrb[0].mxu0 %v573
        %v789 = vpop.f32.mrb[0].mxu0
        %v790 = vadd.f32 0.0, %v789
        %v791 = vpop.f32.mrb[0].mxu0
        %792 = vdwg.mxu0
        %793 = vmatprep.subr.mxu0 0.0
        %794 = vmatpush1.msra.mxu0 %v415
        %795 = vmatprep.subr.mxu0 0.0
        %796 = vmatpush1.msra.mxu0 %v416
        %797 = vmatprep.subr.mxu0 0.0
        %798 = vmatpush1.msra.mxu0 0.0
        %799 = vmatprep.subr.mxu0 0.0
        %800 = vmatpush1.msra.mxu0 0.0
        %801 = vmatprep.subr.mxu0 0.0
        %802 = vmatpush1.msra.mxu0 0.0
        %803 = vmatprep.subr.mxu0 0.0
        %804 = vmatpush1.msra.mxu0 0.0
        %805 = vmatprep.subr.mxu0 0.0
        %806 = vmatpush1.msra.mxu0 0.0
        %807 = vmatprep.subr.mxu0 0.0
        %808 = vmatpush1.msra.mxu0 0.0
        %809 = vmatprep.subr.mxu0 0.0
        %810 = vmatpush1.msra.mxu0 0.0
        %811 = vmatprep.subr.mxu0 0.0
        %812 = vmatpush1.msra.mxu0 0.0
        %813 = vmatprep.subr.mxu0 0.0
        %814 = vmatpush1.msra.mxu0 0.0
        %815 = vmatprep.subr.mxu0 0.0
        %816 = vmatpush1.msra.mxu0 0.0
        %817 = vmatprep.subr.mxu0 0.0
        %818 = vmatpush1.msra.mxu0 0.0
        %819 = vmatprep.subr.mxu0 0.0
        %820 = vmatpush1.msra.mxu0 0.0
        %821 = vmatprep.subr.mxu0 0.0
        %822 = vmatpush1.msra.mxu0 0.0
        %823 = vmatprep.subr.mxu0 0.0
        %824 = vmatpush1.msra.mxu0 0.0
        %825 = vmatprep.subr.mxu0 0.0
        %826 = vmatpush1.msra.mxu0 0.0
        %827 = vmatprep.subr.mxu0 0.0
        %828 = vmatpush1.msra.mxu0 0.0
        %829 = vmatprep.subr.mxu0 0.0
        %830 = vmatpush1.msra.mxu0 0.0
        %831 = vmatprep.subr.mxu0 0.0
        %832 = vmatpush1.msra.mxu0 0.0
        %833 = vmatprep.subr.mxu0 0.0
        %834 = vmatpush1.msra.mxu0 0.0
        %835 = vmatprep.subr.mxu0 0.0
        %836 = vmatpush1.msra.mxu0 0.0
        %837 = vmatprep.subr.mxu0 0.0
        %838 = vmatpush1.msra.mxu0 0.0
        %839 = vmatprep.subr.mxu0 0.0
        %840 = vmatpush1.msra.mxu0 0.0
        %841 = vmatprep.subr.mxu0 0.0
        %842 = vmatpush1.msra.mxu0 0.0
        %843 = vmatprep.subr.mxu0 0.0
        %844 = vmatpush1.msra.mxu0 0.0
        %845 = vmatprep.subr.mxu0 0.0
        %846 = vmatpush1.msra.mxu0 0.0
        %847 = vmatprep.subr.mxu0 0.0
        %848 = vmatpush1.msra.mxu0 0.0
        %849 = vmatprep.subr.mxu0 0.0
        %850 = vmatpush1.msra.mxu0 0.0
        %851 = vmatprep.subr.mxu0 0.0
        %852 = vmatpush1.msra.mxu0 0.0
        %853 = vmatprep.subr.mxu0 0.0
        %854 = vmatpush1.msra.mxu0 0.0
        %855 = vmatprep.subr.mxu0 0.0
        %856 = vmatpush1.msra.mxu0 0.0
        %857 = vmatprep.mubr.f32.mxu0 0.0
        %858 = vmatmul.mubr.f32.gmra.mrb[0].mxu0 %v423
        %v859 = vpop.f32.mrb[0].mxu0
        %v860 = vadd.f32 %v755, %v859
        %v861 = vpop.f32.mrb[0].mxu0
        %862 = vmatprep.mubr.f32.mxu0 0.0
        %863 = vmatmul.mubr.f32.gmra.mrb[0].mxu0 %v426
        %v864 = vpop.f32.mrb[0].mxu0
        %v865 = vadd.f32 %v760, %v864
        %v866 = vpop.f32.mrb[0].mxu0
        %867 = vmatprep.mubr.f32.mxu0 0.0
        %868 = vmatmul.mubr.f32.gmra.mrb[0].mxu0 %v429
        %v869 = vpop.f32.mrb[0].mxu0
        %v870 = vadd.f32 %v765, %v869
        %v871 = vpop.f32.mrb[0].mxu0
        %872 = vmatprep.mubr.f32.mxu0 0.0
        %873 = vmatmul.mubr.f32.gmra.mrb[0].mxu0 %v432
        %v874 = vpop.f32.mrb[0].mxu0
        %v875 = vadd.f32 %v770, %v874
        %v876 = vpop.f32.mrb[0].mxu0
        %877 = vmatprep.mubr.f32.mxu0 0.0
        %878 = vmatmul.mubr.f32.gmra.mrb[0].mxu0 %v435
        %v879 = vpop.f32.mrb[0].mxu0
        %v880 = vadd.f32 %v775, %v879
        %v881 = vpop.f32.mrb[0].mxu0
        %882 = vmatprep.mubr.f32.mxu0 0.0
        %883 = vmatmul.mubr.f32.gmra.mrb[0].mxu0 %v438
        %v884 = vpop.f32.mrb[0].mxu0
        %v885 = vadd.f32 %v780, %v884
        %v886 = vpop.f32.mrb[0].mxu0
        %887 = vmatprep.mubr.f32.mxu0 0.0
        %888 = vmatmul.mubr.f32.gmra.mrb[0].mxu0 %v441
        %v889 = vpop.f32.mrb[0].mxu0
        %v890 = vadd.f32 %v785, %v889
        %v891 = vpop.f32.mrb[0].mxu0
        %892 = vmatprep.mubr.f32.mxu0 0.0
        %893 = vmatmul.mubr.f32.gmra.mrb[0].mxu0 %v444
        %v894 = vpop.f32.mrb[0].mxu0
        %v895 = vadd.f32 %v790, %v894
        %v896 = vpop.f32.mrb[0].mxu0
        %897 = vdwg.mxu0
        %898 = vxpose.xlu0.b32.start [1/16] %v680, 128
        %899 = vxpose.xlu0.b32.cont [2/16] %v681, 128
        %900 = vxpose.xlu0.b32.cont [3/16] 0.0, 128
        %901 = vxpose.xlu0.b32.cont [4/16] 0.0, 128
        %902 = vxpose.xlu0.b32.cont [5/16] 0.0, 128
        %903 = vxpose.xlu0.b32.cont [6/16] 0.0, 128
        %904 = vxpose.xlu0.b32.cont [7/16] 0.0, 128
        %905 = vxpose.xlu0.b32.cont [8/16] 0.0, 128
        %906 = vxpose.xlu0.b32.cont [9/16] 0.0, 128
        %907 = vxpose.xlu0.b32.cont [10/16] 0.0, 128
        %908 = vxpose.xlu0.b32.cont [11/16] 0.0, 128
        %909 = vxpose.xlu0.b32.cont [12/16] 0.0, 128
        %910 = vxpose.xlu0.b32.cont [13/16] 0.0, 128
        %911 = vxpose.xlu0.b32.cont [14/16] 0.0, 128
        %912 = vxpose.xlu0.b32.cont [15/16] 0.0, 128
        %913 = vxpose.xlu0.b32.end [16/16] 0.0, 128
        %v914 = vpop.trf.xlu0
        %v915 = vpop.trf.xlu0
        %v916 = vpop.trf.xlu0
        %v917 = vpop.trf.xlu0
        %v918 = vpop.trf.xlu0
        %v919 = vpop.trf.xlu0
        %v920 = vpop.trf.xlu0
        %v921 = vpop.trf.xlu0
        %v922 = vpop.trf.xlu0
        %v923 = vpop.trf.xlu0
        %v924 = vpop.trf.xlu0
        %v925 = vpop.trf.xlu0
        %v926 = vpop.trf.xlu0
        %v927 = vpop.trf.xlu0
        %v928 = vpop.trf.xlu0
        %v929 = vpop.trf.xlu0
        %930 = vxpose.xlu0.b32.start [1/16] %v682, 128
        %931 = vxpose.xlu0.b32.cont [2/16] %v683, 128
        %932 = vxpose.xlu0.b32.cont [3/16] 0.0, 128
        %933 = vxpose.xlu0.b32.cont [4/16] 0.0, 128
        %934 = vxpose.xlu0.b32.cont [5/16] 0.0, 128
        %935 = vxpose.xlu0.b32.cont [6/16] 0.0, 128
        %936 = vxpose.xlu0.b32.cont [7/16] 0.0, 128
        %937 = vxpose.xlu0.b32.cont [8/16] 0.0, 128
        %938 = vxpose.xlu0.b32.cont [9/16] 0.0, 128
        %939 = vxpose.xlu0.b32.cont [10/16] 0.0, 128
        %940 = vxpose.xlu0.b32.cont [11/16] 0.0, 128
        %941 = vxpose.xlu0.b32.cont [12/16] 0.0, 128
        %942 = vxpose.xlu0.b32.cont [13/16] 0.0, 128
        %943 = vxpose.xlu0.b32.cont [14/16] 0.0, 128
        %944 = vxpose.xlu0.b32.cont [15/16] 0.0, 128
        %945 = vxpose.xlu0.b32.end [16/16] 0.0, 128
        %v946 = vpop.trf.xlu0
        %v947 = vpop.trf.xlu0
        %v948 = vpop.trf.xlu0
        %v949 = vpop.trf.xlu0
        %v950 = vpop.trf.xlu0
        %v951 = vpop.trf.xlu0
        %v952 = vpop.trf.xlu0
        %v953 = vpop.trf.xlu0
        %v954 = vpop.trf.xlu0
        %v955 = vpop.trf.xlu0
        %v956 = vpop.trf.xlu0
        %v957 = vpop.trf.xlu0
        %v958 = vpop.trf.xlu0
        %v959 = vpop.trf.xlu0
        %v960 = vpop.trf.xlu0
        %v961 = vpop.trf.xlu0
        %962 = vxpose.xlu0.b32.start [1/16] %v684, 128
        %963 = vxpose.xlu0.b32.cont [2/16] %v685, 128
        %964 = vxpose.xlu0.b32.cont [3/16] 0.0, 128
        %965 = vxpose.xlu0.b32.cont [4/16] 0.0, 128
        %966 = vxpose.xlu0.b32.cont [5/16] 0.0, 128
        %967 = vxpose.xlu0.b32.cont [6/16] 0.0, 128
        %968 = vxpose.xlu0.b32.cont [7/16] 0.0, 128
        %969 = vxpose.xlu0.b32.cont [8/16] 0.0, 128
        %970 = vxpose.xlu0.b32.cont [9/16] 0.0, 128
        %971 = vxpose.xlu0.b32.cont [10/16] 0.0, 128
        %972 = vxpose.xlu0.b32.cont [11/16] 0.0, 128
        %973 = vxpose.xlu0.b32.cont [12/16] 0.0, 128
        %974 = vxpose.xlu0.b32.cont [13/16] 0.0, 128
        %975 = vxpose.xlu0.b32.cont [14/16] 0.0, 128
        %976 = vxpose.xlu0.b32.cont [15/16] 0.0, 128
        %977 = vxpose.xlu0.b32.end [16/16] 0.0, 128
        %v978 = vpop.trf.xlu0
        %v979 = vpop.trf.xlu0
        %v980 = vpop.trf.xlu0
        %v981 = vpop.trf.xlu0
        %v982 = vpop.trf.xlu0
        %v983 = vpop.trf.xlu0
        %v984 = vpop.trf.xlu0
        %v985 = vpop.trf.xlu0
        %v986 = vpop.trf.xlu0
        %v987 = vpop.trf.xlu0
        %v988 = vpop.trf.xlu0
        %v989 = vpop.trf.xlu0
        %v990 = vpop.trf.xlu0
        %v991 = vpop.trf.xlu0
        %v992 = vpop.trf.xlu0
        %v993 = vpop.trf.xlu0
        %994 = vxpose.xlu0.b32.start [1/16] %v686, 128
        %995 = vxpose.xlu0.b32.cont [2/16] %v687, 128
        %996 = vxpose.xlu0.b32.cont [3/16] 0.0, 128
        %997 = vxpose.xlu0.b32.cont [4/16] 0.0, 128
        %998 = vxpose.xlu0.b32.cont [5/16] 0.0, 128
        %999 = vxpose.xlu0.b32.cont [6/16] 0.0, 128
        %1000 = vxpose.xlu0.b32.cont [7/16] 0.0, 128
        %1001 = vxpose.xlu0.b32.cont [8/16] 0.0, 128
        %1002 = vxpose.xlu0.b32.cont [9/16] 0.0, 128
        %1003 = vxpose.xlu0.b32.cont [10/16] 0.0, 128
        %1004 = vxpose.xlu0.b32.cont [11/16] 0.0, 128
        %1005 = vxpose.xlu0.b32.cont [12/16] 0.0, 128
        %1006 = vxpose.xlu0.b32.cont [13/16] 0.0, 128
        %1007 = vxpose.xlu0.b32.cont [14/16] 0.0, 128
        %1008 = vxpose.xlu0.b32.cont [15/16] 0.0, 128
        %1009 = vxpose.xlu0.b32.end [16/16] 0.0, 128
        %v1010 = vpop.trf.xlu0
        %v1011 = vpop.trf.xlu0
        %v1012 = vpop.trf.xlu0
        %v1013 = vpop.trf.xlu0
        %v1014 = vpop.trf.xlu0
        %v1015 = vpop.trf.xlu0
        %v1016 = vpop.trf.xlu0
        %v1017 = vpop.trf.xlu0
        %v1018 = vpop.trf.xlu0
        %v1019 = vpop.trf.xlu0
        %v1020 = vpop.trf.xlu0
        %v1021 = vpop.trf.xlu0
        %v1022 = vpop.trf.xlu0
        %v1023 = vpop.trf.xlu0
        %v1024 = vpop.trf.xlu0
        %v1025 = vpop.trf.xlu0
        %1026 = vxpose.xlu0.b32.start [1/16] %v860, 128
        %1027 = vxpose.xlu0.b32.cont [2/16] %v865, 128
        %1028 = vxpose.xlu0.b32.cont [3/16] 0.0, 128
        %1029 = vxpose.xlu0.b32.cont [4/16] 0.0, 128
        %1030 = vxpose.xlu0.b32.cont [5/16] 0.0, 128
        %1031 = vxpose.xlu0.b32.cont [6/16] 0.0, 128
        %1032 = vxpose.xlu0.b32.cont [7/16] 0.0, 128
        %1033 = vxpose.xlu0.b32.cont [8/16] 0.0, 128
        %1034 = vxpose.xlu0.b32.cont [9/16] 0.0, 128
        %1035 = vxpose.xlu0.b32.cont [10/16] 0.0, 128
        %1036 = vxpose.xlu0.b32.cont [11/16] 0.0, 128
        %1037 = vxpose.xlu0.b32.cont [12/16] 0.0, 128
        %1038 = vxpose.xlu0.b32.cont [13/16] 0.0, 128
        %1039 = vxpose.xlu0.b32.cont [14/16] 0.0, 128
        %1040 = vxpose.xlu0.b32.cont [15/16] 0.0, 128
        %1041 = vxpose.xlu0.b32.end [16/16] 0.0, 128
        %v1042 = vpop.trf.xlu0
        %v1043 = vpop.trf.xlu0
        %v1044 = vpop.trf.xlu0
        %v1045 = vpop.trf.xlu0
        %v1046 = vpop.trf.xlu0
        %v1047 = vpop.trf.xlu0
        %v1048 = vpop.trf.xlu0
        %v1049 = vpop.trf.xlu0
        %v1050 = vpop.trf.xlu0
        %v1051 = vpop.trf.xlu0
        %v1052 = vpop.trf.xlu0
        %v1053 = vpop.trf.xlu0
        %v1054 = vpop.trf.xlu0
        %v1055 = vpop.trf.xlu0
        %v1056 = vpop.trf.xlu0
        %v1057 = vpop.trf.xlu0
        %1058 = vxpose.xlu0.b32.start [1/16] %v870, 128
        %1059 = vxpose.xlu0.b32.cont [2/16] %v875, 128
        %1060 = vxpose.xlu0.b32.cont [3/16] 0.0, 128
        %1061 = vxpose.xlu0.b32.cont [4/16] 0.0, 128
        %1062 = vxpose.xlu0.b32.cont [5/16] 0.0, 128
        %1063 = vxpose.xlu0.b32.cont [6/16] 0.0, 128
        %1064 = vxpose.xlu0.b32.cont [7/16] 0.0, 128
        %1065 = vxpose.xlu0.b32.cont [8/16] 0.0, 128
        %1066 = vxpose.xlu0.b32.cont [9/16] 0.0, 128
        %1067 = vxpose.xlu0.b32.cont [10/16] 0.0, 128
        %1068 = vxpose.xlu0.b32.cont [11/16] 0.0, 128
        %1069 = vxpose.xlu0.b32.cont [12/16] 0.0, 128
        %1070 = vxpose.xlu0.b32.cont [13/16] 0.0, 128
        %1071 = vxpose.xlu0.b32.cont [14/16] 0.0, 128
        %1072 = vxpose.xlu0.b32.cont [15/16] 0.0, 128
        %1073 = vxpose.xlu0.b32.end [16/16] 0.0, 128
        %v1074 = vpop.trf.xlu0
        %v1075 = vpop.trf.xlu0
        %v1076 = vpop.trf.xlu0
        %v1077 = vpop.trf.xlu0
        %v1078 = vpop.trf.xlu0
        %v1079 = vpop.trf.xlu0
        %v1080 = vpop.trf.xlu0
        %v1081 = vpop.trf.xlu0
        %v1082 = vpop.trf.xlu0
        %v1083 = vpop.trf.xlu0
        %v1084 = vpop.trf.xlu0
        %v1085 = vpop.trf.xlu0
        %v1086 = vpop.trf.xlu0
        %v1087 = vpop.trf.xlu0
        %v1088 = vpop.trf.xlu0
        %v1089 = vpop.trf.xlu0
        %1090 = vxpose.xlu0.b32.start [1/16] %v880, 128
        %1091 = vxpose.xlu0.b32.cont [2/16] %v885, 128
        %1092 = vxpose.xlu0.b32.cont [3/16] 0.0, 128
        %1093 = vxpose.xlu0.b32.cont [4/16] 0.0, 128
        %1094 = vxpose.xlu0.b32.cont [5/16] 0.0, 128
        %1095 = vxpose.xlu0.b32.cont [6/16] 0.0, 128
        %1096 = vxpose.xlu0.b32.cont [7/16] 0.0, 128
        %1097 = vxpose.xlu0.b32.cont [8/16] 0.0, 128
        %1098 = vxpose.xlu0.b32.cont [9/16] 0.0, 128
        %1099 = vxpose.xlu0.b32.cont [10/16] 0.0, 128
        %1100 = vxpose.xlu0.b32.cont [11/16] 0.0, 128
        %1101 = vxpose.xlu0.b32.cont [12/16] 0.0, 128
        %1102 = vxpose.xlu0.b32.cont [13/16] 0.0, 128
        %1103 = vxpose.xlu0.b32.cont [14/16] 0.0, 128
        %1104 = vxpose.xlu0.b32.cont [15/16] 0.0, 128
        %1105 = vxpose.xlu0.b32.end [16/16] 0.0, 128
        %v1106 = vpop.trf.xlu0
        %v1107 = vpop.trf.xlu0
        %v1108 = vpop.trf.xlu0
        %v1109 = vpop.trf.xlu0
        %v1110 = vpop.trf.xlu0
        %v1111 = vpop.trf.xlu0
        %v1112 = vpop.trf.xlu0
        %v1113 = vpop.trf.xlu0
        %v1114 = vpop.trf.xlu0
        %v1115 = vpop.trf.xlu0
        %v1116 = vpop.trf.xlu0
        %v1117 = vpop.trf.xlu0
        %v1118 = vpop.trf.xlu0
        %v1119 = vpop.trf.xlu0
        %v1120 = vpop.trf.xlu0
        %v1121 = vpop.trf.xlu0
        %1122 = vxpose.xlu0.b32.start [1/16] %v890, 128
        %1123 = vxpose.xlu0.b32.cont [2/16] %v895, 128
        %1124 = vxpose.xlu0.b32.cont [3/16] 0.0, 128
        %1125 = vxpose.xlu0.b32.cont [4/16] 0.0, 128
        %1126 = vxpose.xlu0.b32.cont [5/16] 0.0, 128
        %1127 = vxpose.xlu0.b32.cont [6/16] 0.0, 128
        %1128 = vxpose.xlu0.b32.cont [7/16] 0.0, 128
        %1129 = vxpose.xlu0.b32.cont [8/16] 0.0, 128
        %1130 = vxpose.xlu0.b32.cont [9/16] 0.0, 128
        %1131 = vxpose.xlu0.b32.cont [10/16] 0.0, 128
        %1132 = vxpose.xlu0.b32.cont [11/16] 0.0, 128
        %1133 = vxpose.xlu0.b32.cont [12/16] 0.0, 128
        %1134 = vxpose.xlu0.b32.cont [13/16] 0.0, 128
        %1135 = vxpose.xlu0.b32.cont [14/16] 0.0, 128
        %1136 = vxpose.xlu0.b32.cont [15/16] 0.0, 128
        %1137 = vxpose.xlu0.b32.end [16/16] 0.0, 128
        %v1138 = vpop.trf.xlu0
        %v1139 = vpop.trf.xlu0
        %v1140 = vpop.trf.xlu0
        %v1141 = vpop.trf.xlu0
        %v1142 = vpop.trf.xlu0
        %v1143 = vpop.trf.xlu0
        %v1144 = vpop.trf.xlu0
        %v1145 = vpop.trf.xlu0
        %v1146 = vpop.trf.xlu0
        %v1147 = vpop.trf.xlu0
        %v1148 = vpop.trf.xlu0
        %v1149 = vpop.trf.xlu0
        %v1150 = vpop.trf.xlu0
        %v1151 = vpop.trf.xlu0
        %v1152 = vpop.trf.xlu0
        %v1153 = vpop.trf.xlu0
        %v1155 = vsel %vm421, %v914, 0
        %v1158 = vsel %vm421, %v915, 0
        %v1161 = vsel %vm421, %v946, 0
        %v1164 = vsel %vm421, %v947, 0
        %v1167 = vsel %vm421, %v978, 0
        %v1170 = vsel %vm421, %v979, 0
        %v1173 = vsel %vm421, %v1010, 0
        %v1176 = vsel %vm421, %v1011, 0
        %1178 = vmatprep.subr.mxu0 0.0
        %1179 = vmatpush1.msra.mxu0 %v417
        %1180 = vmatprep.subr.mxu0 0.0
        %1181 = vmatpush1.msra.mxu0 %v418
        %1182 = vmatprep.subr.mxu0 0.0
        %1183 = vmatpush1.msra.mxu0 0.0
        %1184 = vmatprep.subr.mxu0 0.0
        %1185 = vmatpush1.msra.mxu0 0.0
        %1186 = vmatprep.subr.mxu0 0.0
        %1187 = vmatpush1.msra.mxu0 0.0
        %1188 = vmatprep.subr.mxu0 0.0
        %1189 = vmatpush1.msra.mxu0 0.0
        %1190 = vmatprep.subr.mxu0 0.0
        %1191 = vmatpush1.msra.mxu0 0.0
        %1192 = vmatprep.subr.mxu0 0.0
        %1193 = vmatpush1.msra.mxu0 0.0
        %1194 = vmatprep.subr.mxu0 0.0
        %1195 = vmatpush1.msra.mxu0 0.0
        %1196 = vmatprep.subr.mxu0 0.0
        %1197 = vmatpush1.msra.mxu0 0.0
        %1198 = vmatprep.subr.mxu0 0.0
        %1199 = vmatpush1.msra.mxu0 0.0
        %1200 = vmatprep.subr.mxu0 0.0
        %1201 = vmatpush1.msra.mxu0 0.0
        %1202 = vmatprep.subr.mxu0 0.0
        %1203 = vmatpush1.msra.mxu0 0.0
        %1204 = vmatprep.subr.mxu0 0.0
        %1205 = vmatpush1.msra.mxu0 0.0
        %1206 = vmatprep.subr.mxu0 0.0
        %1207 = vmatpush1.msra.mxu0 0.0
        %1208 = vmatprep.subr.mxu0 0.0
        %1209 = vmatpush1.msra.mxu0 0.0
        %1210 = vmatprep.subr.mxu0 0.0
        %1211 = vmatpush1.msra.mxu0 0.0
        %1212 = vmatprep.subr.mxu0 0.0
        %1213 = vmatpush1.msra.mxu0 0.0
        %1214 = vmatprep.subr.mxu0 0.0
        %1215 = vmatpush1.msra.mxu0 0.0
        %1216 = vmatprep.subr.mxu0 0.0
        %1217 = vmatpush1.msra.mxu0 0.0
        %1218 = vmatprep.subr.mxu0 0.0
        %1219 = vmatpush1.msra.mxu0 0.0
        %1220 = vmatprep.subr.mxu0 0.0
        %1221 = vmatpush1.msra.mxu0 0.0
        %1222 = vmatprep.subr.mxu0 0.0
        %1223 = vmatpush1.msra.mxu0 0.0
        %1224 = vmatprep.subr.mxu0 0.0
        %1225 = vmatpush1.msra.mxu0 0.0
        %1226 = vmatprep.subr.mxu0 0.0
        %1227 = vmatpush1.msra.mxu0 0.0
        %1228 = vmatprep.subr.mxu0 0.0
        %1229 = vmatpush1.msra.mxu0 0.0
        %1230 = vmatprep.subr.mxu0 0.0
        %1231 = vmatpush1.msra.mxu0 0.0
        %1232 = vmatprep.subr.mxu0 0.0
        %1233 = vmatpush1.msra.mxu0 0.0
        %1234 = vmatprep.subr.mxu0 0.0
        %1235 = vmatpush1.msra.mxu0 0.0
        %1236 = vmatprep.subr.mxu0 0.0
        %1237 = vmatpush1.msra.mxu0 0.0
        %1238 = vmatprep.subr.mxu0 0.0
        %1239 = vmatpush1.msra.mxu0 0.0
        %1240 = vmatprep.subr.mxu0 0.0
        %1241 = vmatpush1.msra.mxu0 0.0
        %1242 = vmatprep.mubr.f32.mxu0 0.0
        %1243 = vmatmul.mubr.f32.gmra.mrb[0].mxu0 %v1155
        %v1244 = vpop.f32.mrb[0].mxu0
        %v1245 = vadd.f32 0.0, %v1244
        %v1246 = vpop.f32.mrb[0].mxu0
        %1247 = vmatprep.mubr.f32.mxu0 0.0
        %1248 = vmatmul.mubr.f32.gmra.mrb[0].mxu0 %v1158
        %v1249 = vpop.f32.mrb[0].mxu0
        %v1250 = vadd.f32 0.0, %v1249
        %v1251 = vpop.f32.mrb[0].mxu0
        %1252 = vmatprep.mubr.f32.mxu0 0.0
        %1253 = vmatmul.mubr.f32.gmra.mrb[0].mxu0 %v1161
        %v1254 = vpop.f32.mrb[0].mxu0
        %v1255 = vadd.f32 0.0, %v1254
        %v1256 = vpop.f32.mrb[0].mxu0
        %1257 = vmatprep.mubr.f32.mxu0 0.0
        %1258 = vmatmul.mubr.f32.gmra.mrb[0].mxu0 %v1164
        %v1259 = vpop.f32.mrb[0].mxu0
        %v1260 = vadd.f32 0.0, %v1259
        %v1261 = vpop.f32.mrb[0].mxu0
        %1262 = vmatprep.mubr.f32.mxu0 0.0
        %1263 = vmatmul.mubr.f32.gmra.mrb[0].mxu0 %v1167
        %v1264 = vpop.f32.mrb[0].mxu0
        %v1265 = vadd.f32 0.0, %v1264
        %v1266 = vpop.f32.mrb[0].mxu0
        %1267 = vmatprep.mubr.f32.mxu0 0.0
        %1268 = vmatmul.mubr.f32.gmra.mrb[0].mxu0 %v1170
        %v1269 = vpop.f32.mrb[0].mxu0
        %v1270 = vadd.f32 0.0, %v1269
        %v1271 = vpop.f32.mrb[0].mxu0
        %1272 = vmatprep.mubr.f32.mxu0 0.0
        %1273 = vmatmul.mubr.f32.gmra.mrb[0].mxu0 %v1173
        %v1274 = vpop.f32.mrb[0].mxu0
        %v1275 = vadd.f32 0.0, %v1274
        %v1276 = vpop.f32.mrb[0].mxu0
        %1277 = vmatprep.mubr.f32.mxu0 0.0
        %1278 = vmatmul.mubr.f32.gmra.mrb[0].mxu0 %v1176
        %v1279 = vpop.f32.mrb[0].mxu0
        %v1280 = vadd.f32 0.0, %v1279
        %v1281 = vpop.f32.mrb[0].mxu0
        %1282 = vdwg.mxu0
        %v1284 = vsel %vm421, %v1042, 0
        %v1287 = vsel %vm421, %v1043, 0
        %v1290 = vsel %vm421, %v1074, 0
        %v1293 = vsel %vm421, %v1075, 0
        %v1296 = vsel %vm421, %v1106, 0
        %v1299 = vsel %vm421, %v1107, 0
        %v1302 = vsel %vm421, %v1138, 0
        %v1305 = vsel %vm421, %v1139, 0
        %1307 = vmatprep.subr.mxu0 0.0
        %1308 = vmatpush1.msra.mxu0 %v419
        %1309 = vmatprep.subr.mxu0 0.0
        %1310 = vmatpush1.msra.mxu0 %v420
        %1311 = vmatprep.subr.mxu0 0.0
        %1312 = vmatpush1.msra.mxu0 0.0
        %1313 = vmatprep.subr.mxu0 0.0
        %1314 = vmatpush1.msra.mxu0 0.0
        %1315 = vmatprep.subr.mxu0 0.0
        %1316 = vmatpush1.msra.mxu0 0.0
        %1317 = vmatprep.subr.mxu0 0.0
        %1318 = vmatpush1.msra.mxu0 0.0
        %1319 = vmatprep.subr.mxu0 0.0
        %1320 = vmatpush1.msra.mxu0 0.0
        %1321 = vmatprep.subr.mxu0 0.0
        %1322 = vmatpush1.msra.mxu0 0.0
        %1323 = vmatprep.subr.mxu0 0.0
        %1324 = vmatpush1.msra.mxu0 0.0
        %1325 = vmatprep.subr.mxu0 0.0
        %1326 = vmatpush1.msra.mxu0 0.0
        %1327 = vmatprep.subr.mxu0 0.0
        %1328 = vmatpush1.msra.mxu0 0.0
        %1329 = vmatprep.subr.mxu0 0.0
        %1330 = vmatpush1.msra.mxu0 0.0
        %1331 = vmatprep.subr.mxu0 0.0
        %1332 = vmatpush1.msra.mxu0 0.0
        %1333 = vmatprep.subr.mxu0 0.0
        %1334 = vmatpush1.msra.mxu0 0.0
        %1335 = vmatprep.subr.mxu0 0.0
        %1336 = vmatpush1.msra.mxu0 0.0
        %1337 = vmatprep.subr.mxu0 0.0
        %1338 = vmatpush1.msra.mxu0 0.0
        %1339 = vmatprep.subr.mxu0 0.0
        %1340 = vmatpush1.msra.mxu0 0.0
        %1341 = vmatprep.subr.mxu0 0.0
        %1342 = vmatpush1.msra.mxu0 0.0
        %1343 = vmatprep.subr.mxu0 0.0
        %1344 = vmatpush1.msra.mxu0 0.0
        %1345 = vmatprep.subr.mxu0 0.0
        %1346 = vmatpush1.msra.mxu0 0.0
        %1347 = vmatprep.subr.mxu0 0.0
        %1348 = vmatpush1.msra.mxu0 0.0
        %1349 = vmatprep.subr.mxu0 0.0
        %1350 = vmatpush1.msra.mxu0 0.0
        %1351 = vmatprep.subr.mxu0 0.0
        %1352 = vmatpush1.msra.mxu0 0.0
        %1353 = vmatprep.subr.mxu0 0.0
        %1354 = vmatpush1.msra.mxu0 0.0
        %1355 = vmatprep.subr.mxu0 0.0
        %1356 = vmatpush1.msra.mxu0 0.0
        %1357 = vmatprep.subr.mxu0 0.0
        %1358 = vmatpush1.msra.mxu0 0.0
        %1359 = vmatprep.subr.mxu0 0.0
        %1360 = vmatpush1.msra.mxu0 0.0
        %1361 = vmatprep.subr.mxu0 0.0
        %1362 = vmatpush1.msra.mxu0 0.0
        %1363 = vmatprep.subr.mxu0 0.0
        %1364 = vmatpush1.msra.mxu0 0.0
        %1365 = vmatprep.subr.mxu0 0.0
        %1366 = vmatpush1.msra.mxu0 0.0
        %1367 = vmatprep.subr.mxu0 0.0
        %1368 = vmatpush1.msra.mxu0 0.0
        %1369 = vmatprep.subr.mxu0 0.0
        %1370 = vmatpush1.msra.mxu0 0.0
        %1371 = vmatprep.mubr.f32.mxu0 0.0
        %1372 = vmatmul.mubr.f32.gmra.mrb[0].mxu0 %v1284
        %v1373 = vpop.f32.mrb[0].mxu0
        %v1374 = vadd.f32 0.0, %v1373
        %v1375 = vpop.f32.mrb[0].mxu0
        %1376 = vmatprep.mubr.f32.mxu0 0.0
        %1377 = vmatmul.mubr.f32.gmra.mrb[0].mxu0 %v1287
        %v1378 = vpop.f32.mrb[0].mxu0
        %v1379 = vadd.f32 0.0, %v1378
        %v1380 = vpop.f32.mrb[0].mxu0
        %1381 = vmatprep.mubr.f32.mxu0 0.0
        %1382 = vmatmul.mubr.f32.gmra.mrb[0].mxu0 %v1290
        %v1383 = vpop.f32.mrb[0].mxu0
        %v1384 = vadd.f32 0.0, %v1383
        %v1385 = vpop.f32.mrb[0].mxu0
        %1386 = vmatprep.mubr.f32.mxu0 0.0
        %1387 = vmatmul.mubr.f32.gmra.mrb[0].mxu0 %v1293
        %v1388 = vpop.f32.mrb[0].mxu0
        %v1389 = vadd.f32 0.0, %v1388
        %v1390 = vpop.f32.mrb[0].mxu0
        %1391 = vmatprep.mubr.f32.mxu0 0.0
        %1392 = vmatmul.mubr.f32.gmra.mrb[0].mxu0 %v1296
        %v1393 = vpop.f32.mrb[0].mxu0
        %v1394 = vadd.f32 0.0, %v1393
        %v1395 = vpop.f32.mrb[0].mxu0
        %1396 = vmatprep.mubr.f32.mxu0 0.0
        %1397 = vmatmul.mubr.f32.gmra.mrb[0].mxu0 %v1299
        %v1398 = vpop.f32.mrb[0].mxu0
        %v1399 = vadd.f32 0.0, %v1398
        %v1400 = vpop.f32.mrb[0].mxu0
        %1401 = vmatprep.mubr.f32.mxu0 0.0
        %1402 = vmatmul.mubr.f32.gmra.mrb[0].mxu0 %v1302
        %v1403 = vpop.f32.mrb[0].mxu0
        %v1404 = vadd.f32 0.0, %v1403
        %v1405 = vpop.f32.mrb[0].mxu0
        %1406 = vmatprep.mubr.f32.mxu0 0.0
        %1407 = vmatmul.mubr.f32.gmra.mrb[0].mxu0 %v1305
        %v1408 = vpop.f32.mrb[0].mxu0
        %v1409 = vadd.f32 0.0, %v1408
        %v1410 = vpop.f32.mrb[0].mxu0
        %1411 = vdwg.mxu0
        %v1412 = vsub.f32 %v1245, %v1374
        %v1413 = vsub.f32 %v1250, %v1379
        %v1414 = vsub.f32 %v1255, %v1384
        %v1415 = vsub.f32 %v1260, %v1389
        %v1416 = vsub.f32 %v1265, %v1394
        %v1417 = vsub.f32 %v1270, %v1399
        %v1418 = vsub.f32 %v1275, %v1404
        %v1419 = vsub.f32 %v1280, %v1409
        %1420 = vmatprep.subr.mxu0 0.0
        %1421 = vmatpush1.msra.mxu0 %v417
        %1422 = vmatprep.subr.mxu0 0.0
        %1423 = vmatpush1.msra.mxu0 %v418
        %1424 = vmatprep.subr.mxu0 0.0
        %1425 = vmatpush1.msra.mxu0 0.0
        %1426 = vmatprep.subr.mxu0 0.0
        %1427 = vmatpush1.msra.mxu0 0.0
        %1428 = vmatprep.subr.mxu0 0.0
        %1429 = vmatpush1.msra.mxu0 0.0
        %1430 = vmatprep.subr.mxu0 0.0
        %1431 = vmatpush1.msra.mxu0 0.0
        %1432 = vmatprep.subr.mxu0 0.0
        %1433 = vmatpush1.msra.mxu0 0.0
        %1434 = vmatprep.subr.mxu0 0.0
        %1435 = vmatpush1.msra.mxu0 0.0
        %1436 = vmatprep.subr.mxu0 0.0
        %1437 = vmatpush1.msra.mxu0 0.0
        %1438 = vmatprep.subr.mxu0 0.0
        %1439 = vmatpush1.msra.mxu0 0.0
        %1440 = vmatprep.subr.mxu0 0.0
        %1441 = vmatpush1.msra.mxu0 0.0
        %1442 = vmatprep.subr.mxu0 0.0
        %1443 = vmatpush1.msra.mxu0 0.0
        %1444 = vmatprep.subr.mxu0 0.0
        %1445 = vmatpush1.msra.mxu0 0.0
        %1446 = vmatprep.subr.mxu0 0.0
        %1447 = vmatpush1.msra.mxu0 0.0
        %1448 = vmatprep.subr.mxu0 0.0
        %1449 = vmatpush1.msra.mxu0 0.0
        %1450 = vmatprep.subr.mxu0 0.0
        %1451 = vmatpush1.msra.mxu0 0.0
        %1452 = vmatprep.subr.mxu0 0.0
        %1453 = vmatpush1.msra.mxu0 0.0
        %1454 = vmatprep.subr.mxu0 0.0
        %1455 = vmatpush1.msra.mxu0 0.0
        %1456 = vmatprep.subr.mxu0 0.0
        %1457 = vmatpush1.msra.mxu0 0.0
        %1458 = vmatprep.subr.mxu0 0.0
        %1459 = vmatpush1.msra.mxu0 0.0
        %1460 = vmatprep.subr.mxu0 0.0
        %1461 = vmatpush1.msra.mxu0 0.0
        %1462 = vmatprep.subr.mxu0 0.0
        %1463 = vmatpush1.msra.mxu0 0.0
        %1464 = vmatprep.subr.mxu0 0.0
        %1465 = vmatpush1.msra.mxu0 0.0
        %1466 = vmatprep.subr.mxu0 0.0
        %1467 = vmatpush1.msra.mxu0 0.0
        %1468 = vmatprep.subr.mxu0 0.0
        %1469 = vmatpush1.msra.mxu0 0.0
        %1470 = vmatprep.subr.mxu0 0.0
        %1471 = vmatpush1.msra.mxu0 0.0
        %1472 = vmatprep.subr.mxu0 0.0
        %1473 = vmatpush1.msra.mxu0 0.0
        %1474 = vmatprep.subr.mxu0 0.0
        %1475 = vmatpush1.msra.mxu0 0.0
        %1476 = vmatprep.subr.mxu0 0.0
        %1477 = vmatpush1.msra.mxu0 0.0
        %1478 = vmatprep.subr.mxu0 0.0
        %1479 = vmatpush1.msra.mxu0 0.0
        %1480 = vmatprep.subr.mxu0 0.0
        %1481 = vmatpush1.msra.mxu0 0.0
        %1482 = vmatprep.subr.mxu0 0.0
        %1483 = vmatpush1.msra.mxu0 0.0
        %1484 = vmatprep.mubr.f32.mxu0 0.0
        %1485 = vmatmul.mubr.f32.gmra.mrb[0].mxu0 %v1284
        %v1486 = vpop.f32.mrb[0].mxu0
        %v1487 = vadd.f32 0.0, %v1486
        %v1488 = vpop.f32.mrb[0].mxu0
        %1489 = vmatprep.mubr.f32.mxu0 0.0
        %1490 = vmatmul.mubr.f32.gmra.mrb[0].mxu0 %v1287
        %v1491 = vpop.f32.mrb[0].mxu0
        %v1492 = vadd.f32 0.0, %v1491
        %v1493 = vpop.f32.mrb[0].mxu0
        %1494 = vmatprep.mubr.f32.mxu0 0.0
        %1495 = vmatmul.mubr.f32.gmra.mrb[0].mxu0 %v1290
        %v1496 = vpop.f32.mrb[0].mxu0
        %v1497 = vadd.f32 0.0, %v1496
        %v1498 = vpop.f32.mrb[0].mxu0
        %1499 = vmatprep.mubr.f32.mxu0 0.0
        %1500 = vmatmul.mubr.f32.gmra.mrb[0].mxu0 %v1293
        %v1501 = vpop.f32.mrb[0].mxu0
        %v1502 = vadd.f32 0.0, %v1501
        %v1503 = vpop.f32.mrb[0].mxu0
        %1504 = vmatprep.mubr.f32.mxu0 0.0
        %1505 = vmatmul.mubr.f32.gmra.mrb[0].mxu0 %v1296
        %v1506 = vpop.f32.mrb[0].mxu0
        %v1507 = vadd.f32 0.0, %v1506
        %v1508 = vpop.f32.mrb[0].mxu0
        %1509 = vmatprep.mubr.f32.mxu0 0.0
        %1510 = vmatmul.mubr.f32.gmra.mrb[0].mxu0 %v1299
        %v1511 = vpop.f32.mrb[0].mxu0
        %v1512 = vadd.f32 0.0, %v1511
        %v1513 = vpop.f32.mrb[0].mxu0
        %1514 = vmatprep.mubr.f32.mxu0 0.0
        %1515 = vmatmul.mubr.f32.gmra.mrb[0].mxu0 %v1302
        %v1516 = vpop.f32.mrb[0].mxu0
        %v1517 = vadd.f32 0.0, %v1516
        %v1518 = vpop.f32.mrb[0].mxu0
        %1519 = vmatprep.mubr.f32.mxu0 0.0
        %1520 = vmatmul.mubr.f32.gmra.mrb[0].mxu0 %v1305
        %v1521 = vpop.f32.mrb[0].mxu0
        %v1522 = vadd.f32 0.0, %v1521
        %v1523 = vpop.f32.mrb[0].mxu0
        %1524 = vdwg.mxu0
        %1525 = vmatprep.subr.mxu0 0.0
        %1526 = vmatpush1.msra.mxu0 %v419
        %1527 = vmatprep.subr.mxu0 0.0
        %1528 = vmatpush1.msra.mxu0 %v420
        %1529 = vmatprep.subr.mxu0 0.0
        %1530 = vmatpush1.msra.mxu0 0.0
        %1531 = vmatprep.subr.mxu0 0.0
        %1532 = vmatpush1.msra.mxu0 0.0
        %1533 = vmatprep.subr.mxu0 0.0
        %1534 = vmatpush1.msra.mxu0 0.0
        %1535 = vmatprep.subr.mxu0 0.0
        %1536 = vmatpush1.msra.mxu0 0.0
        %1537 = vmatprep.subr.mxu0 0.0
        %1538 = vmatpush1.msra.mxu0 0.0
        %1539 = vmatprep.subr.mxu0 0.0
        %1540 = vmatpush1.msra.mxu0 0.0
        %1541 = vmatprep.subr.mxu0 0.0
        %1542 = vmatpush1.msra.mxu0 0.0
        %1543 = vmatprep.subr.mxu0 0.0
        %1544 = vmatpush1.msra.mxu0 0.0
        %1545 = vmatprep.subr.mxu0 0.0
        %1546 = vmatpush1.msra.mxu0 0.0
        %1547 = vmatprep.subr.mxu0 0.0
        %1548 = vmatpush1.msra.mxu0 0.0
        %1549 = vmatprep.subr.mxu0 0.0
        %1550 = vmatpush1.msra.mxu0 0.0
        %1551 = vmatprep.subr.mxu0 0.0
        %1552 = vmatpush1.msra.mxu0 0.0
        %1553 = vmatprep.subr.mxu0 0.0
        %1554 = vmatpush1.msra.mxu0 0.0
        %1555 = vmatprep.subr.mxu0 0.0
        %1556 = vmatpush1.msra.mxu0 0.0
        %1557 = vmatprep.subr.mxu0 0.0
        %1558 = vmatpush1.msra.mxu0 0.0
        %1559 = vmatprep.subr.mxu0 0.0
        %1560 = vmatpush1.msra.mxu0 0.0
        %1561 = vmatprep.subr.mxu0 0.0
        %1562 = vmatpush1.msra.mxu0 0.0
        %1563 = vmatprep.subr.mxu0 0.0
        %1564 = vmatpush1.msra.mxu0 0.0
        %1565 = vmatprep.subr.mxu0 0.0
        %1566 = vmatpush1.msra.mxu0 0.0
        %1567 = vmatprep.subr.mxu0 0.0
        %1568 = vmatpush1.msra.mxu0 0.0
        %1569 = vmatprep.subr.mxu0 0.0
        %1570 = vmatpush1.msra.mxu0 0.0
        %1571 = vmatprep.subr.mxu0 0.0
        %1572 = vmatpush1.msra.mxu0 0.0
        %1573 = vmatprep.subr.mxu0 0.0
        %1574 = vmatpush1.msra.mxu0 0.0
        %1575 = vmatprep.subr.mxu0 0.0
        %1576 = vmatpush1.msra.mxu0 0.0
        %1577 = vmatprep.subr.mxu0 0.0
        %1578 = vmatpush1.msra.mxu0 0.0
        %1579 = vmatprep.subr.mxu0 0.0
        %1580 = vmatpush1.msra.mxu0 0.0
        %1581 = vmatprep.subr.mxu0 0.0
        %1582 = vmatpush1.msra.mxu0 0.0
        %1583 = vmatprep.subr.mxu0 0.0
        %1584 = vmatpush1.msra.mxu0 0.0
        %1585 = vmatprep.subr.mxu0 0.0
        %1586 = vmatpush1.msra.mxu0 0.0
        %1587 = vmatprep.subr.mxu0 0.0
        %1588 = vmatpush1.msra.mxu0 0.0
        %1589 = vmatprep.mubr.f32.mxu0 0.0
        %1590 = vmatmul.mubr.f32.gmra.mrb[0].mxu0 %v1155
        %v1591 = vpop.f32.mrb[0].mxu0
        %v1592 = vadd.f32 %v1487, %v1591
        %v1593 = vpop.f32.mrb[0].mxu0
        %1594 = vmatprep.mubr.f32.mxu0 0.0
        %1595 = vmatmul.mubr.f32.gmra.mrb[0].mxu0 %v1158
        %v1596 = vpop.f32.mrb[0].mxu0
        %v1597 = vadd.f32 %v1492, %v1596
        %v1598 = vpop.f32.mrb[0].mxu0
        %1599 = vmatprep.mubr.f32.mxu0 0.0
        %1600 = vmatmul.mubr.f32.gmra.mrb[0].mxu0 %v1161
        %v1601 = vpop.f32.mrb[0].mxu0
        %v1602 = vadd.f32 %v1497, %v1601
        %v1603 = vpop.f32.mrb[0].mxu0
        %1604 = vmatprep.mubr.f32.mxu0 0.0
        %1605 = vmatmul.mubr.f32.gmra.mrb[0].mxu0 %v1164
        %v1606 = vpop.f32.mrb[0].mxu0
        %v1607 = vadd.f32 %v1502, %v1606
        %v1608 = vpop.f32.mrb[0].mxu0
        %1609 = vmatprep.mubr.f32.mxu0 0.0
        %1610 = vmatmul.mubr.f32.gmra.mrb[0].mxu0 %v1167
        %v1611 = vpop.f32.mrb[0].mxu0
        %v1612 = vadd.f32 %v1507, %v1611
        %v1613 = vpop.f32.mrb[0].mxu0
        %1614 = vmatprep.mubr.f32.mxu0 0.0
        %1615 = vmatmul.mubr.f32.gmra.mrb[0].mxu0 %v1170
        %v1616 = vpop.f32.mrb[0].mxu0
        %v1617 = vadd.f32 %v1512, %v1616
        %v1618 = vpop.f32.mrb[0].mxu0
        %1619 = vmatprep.mubr.f32.mxu0 0.0
        %1620 = vmatmul.mubr.f32.gmra.mrb[0].mxu0 %v1173
        %v1621 = vpop.f32.mrb[0].mxu0
        %v1622 = vadd.f32 %v1517, %v1621
        %v1623 = vpop.f32.mrb[0].mxu0
        %1624 = vmatprep.mubr.f32.mxu0 0.0
        %1625 = vmatmul.mubr.f32.gmra.mrb[0].mxu0 %v1176
        %v1626 = vpop.f32.mrb[0].mxu0
        %v1627 = vadd.f32 %v1522, %v1626
        %v1628 = vpop.f32.mrb[0].mxu0
        %1629 = vdwg.mxu0
        %1630 = vxpose.xlu0.b32.start [1/16] %v1412, 128
        %1631 = vxpose.xlu0.b32.cont [2/16] %v1413, 128
        %1632 = vxpose.xlu0.b32.cont [3/16] 0.0, 128
        %1633 = vxpose.xlu0.b32.cont [4/16] 0.0, 128
        %1634 = vxpose.xlu0.b32.cont [5/16] 0.0, 128
        %1635 = vxpose.xlu0.b32.cont [6/16] 0.0, 128
        %1636 = vxpose.xlu0.b32.cont [7/16] 0.0, 128
        %1637 = vxpose.xlu0.b32.cont [8/16] 0.0, 128
        %1638 = vxpose.xlu0.b32.cont [9/16] 0.0, 128
        %1639 = vxpose.xlu0.b32.cont [10/16] 0.0, 128
        %1640 = vxpose.xlu0.b32.cont [11/16] 0.0, 128
        %1641 = vxpose.xlu0.b32.cont [12/16] 0.0, 128
        %1642 = vxpose.xlu0.b32.cont [13/16] 0.0, 128
        %1643 = vxpose.xlu0.b32.cont [14/16] 0.0, 128
        %1644 = vxpose.xlu0.b32.cont [15/16] 0.0, 128
        %1645 = vxpose.xlu0.b32.end [16/16] 0.0, 128
        %v1646 = vpop.trf.xlu0
        %v1647 = vpop.trf.xlu0
        %v1648 = vpop.trf.xlu0
        %v1649 = vpop.trf.xlu0
        %v1650 = vpop.trf.xlu0
        %v1651 = vpop.trf.xlu0
        %v1652 = vpop.trf.xlu0
        %v1653 = vpop.trf.xlu0
        %v1654 = vpop.trf.xlu0
        %v1655 = vpop.trf.xlu0
        %v1656 = vpop.trf.xlu0
        %v1657 = vpop.trf.xlu0
        %v1658 = vpop.trf.xlu0
        %v1659 = vpop.trf.xlu0
        %v1660 = vpop.trf.xlu0
        %v1661 = vpop.trf.xlu0
        %1662 = vxpose.xlu0.b32.start [1/16] %v1414, 128
        %1663 = vxpose.xlu0.b32.cont [2/16] %v1415, 128
        %1664 = vxpose.xlu0.b32.cont [3/16] 0.0, 128
        %1665 = vxpose.xlu0.b32.cont [4/16] 0.0, 128
        %1666 = vxpose.xlu0.b32.cont [5/16] 0.0, 128
        %1667 = vxpose.xlu0.b32.cont [6/16] 0.0, 128
        %1668 = vxpose.xlu0.b32.cont [7/16] 0.0, 128
        %1669 = vxpose.xlu0.b32.cont [8/16] 0.0, 128
        %1670 = vxpose.xlu0.b32.cont [9/16] 0.0, 128
        %1671 = vxpose.xlu0.b32.cont [10/16] 0.0, 128
        %1672 = vxpose.xlu0.b32.cont [11/16] 0.0, 128
        %1673 = vxpose.xlu0.b32.cont [12/16] 0.0, 128
        %1674 = vxpose.xlu0.b32.cont [13/16] 0.0, 128
        %1675 = vxpose.xlu0.b32.cont [14/16] 0.0, 128
        %1676 = vxpose.xlu0.b32.cont [15/16] 0.0, 128
        %1677 = vxpose.xlu0.b32.end [16/16] 0.0, 128
        %v1678 = vpop.trf.xlu0
        %v1679 = vpop.trf.xlu0
        %v1680 = vpop.trf.xlu0
        %v1681 = vpop.trf.xlu0
        %v1682 = vpop.trf.xlu0
        %v1683 = vpop.trf.xlu0
        %v1684 = vpop.trf.xlu0
        %v1685 = vpop.trf.xlu0
        %v1686 = vpop.trf.xlu0
        %v1687 = vpop.trf.xlu0
        %v1688 = vpop.trf.xlu0
        %v1689 = vpop.trf.xlu0
        %v1690 = vpop.trf.xlu0
        %v1691 = vpop.trf.xlu0
        %v1692 = vpop.trf.xlu0
        %v1693 = vpop.trf.xlu0
        %1694 = vxpose.xlu0.b32.start [1/16] %v1416, 128
        %1695 = vxpose.xlu0.b32.cont [2/16] %v1417, 128
        %1696 = vxpose.xlu0.b32.cont [3/16] 0.0, 128
        %1697 = vxpose.xlu0.b32.cont [4/16] 0.0, 128
        %1698 = vxpose.xlu0.b32.cont [5/16] 0.0, 128
        %1699 = vxpose.xlu0.b32.cont [6/16] 0.0, 128
        %1700 = vxpose.xlu0.b32.cont [7/16] 0.0, 128
        %1701 = vxpose.xlu0.b32.cont [8/16] 0.0, 128
        %1702 = vxpose.xlu0.b32.cont [9/16] 0.0, 128
        %1703 = vxpose.xlu0.b32.cont [10/16] 0.0, 128
        %1704 = vxpose.xlu0.b32.cont [11/16] 0.0, 128
        %1705 = vxpose.xlu0.b32.cont [12/16] 0.0, 128
        %1706 = vxpose.xlu0.b32.cont [13/16] 0.0, 128
        %1707 = vxpose.xlu0.b32.cont [14/16] 0.0, 128
        %1708 = vxpose.xlu0.b32.cont [15/16] 0.0, 128
        %1709 = vxpose.xlu0.b32.end [16/16] 0.0, 128
        %v1710 = vpop.trf.xlu0
        %v1711 = vpop.trf.xlu0
        %v1712 = vpop.trf.xlu0
        %v1713 = vpop.trf.xlu0
        %v1714 = vpop.trf.xlu0
        %v1715 = vpop.trf.xlu0
        %v1716 = vpop.trf.xlu0
        %v1717 = vpop.trf.xlu0
        %v1718 = vpop.trf.xlu0
        %v1719 = vpop.trf.xlu0
        %v1720 = vpop.trf.xlu0
        %v1721 = vpop.trf.xlu0
        %v1722 = vpop.trf.xlu0
        %v1723 = vpop.trf.xlu0
        %v1724 = vpop.trf.xlu0
        %v1725 = vpop.trf.xlu0
        %1726 = vxpose.xlu0.b32.start [1/16] %v1418, 128
        %1727 = vxpose.xlu0.b32.cont [2/16] %v1419, 128
        %1728 = vxpose.xlu0.b32.cont [3/16] 0.0, 128
        %1729 = vxpose.xlu0.b32.cont [4/16] 0.0, 128
        %1730 = vxpose.xlu0.b32.cont [5/16] 0.0, 128
        %1731 = vxpose.xlu0.b32.cont [6/16] 0.0, 128
        %1732 = vxpose.xlu0.b32.cont [7/16] 0.0, 128
        %1733 = vxpose.xlu0.b32.cont [8/16] 0.0, 128
        %1734 = vxpose.xlu0.b32.cont [9/16] 0.0, 128
        %1735 = vxpose.xlu0.b32.cont [10/16] 0.0, 128
        %1736 = vxpose.xlu0.b32.cont [11/16] 0.0, 128
        %1737 = vxpose.xlu0.b32.cont [12/16] 0.0, 128
        %1738 = vxpose.xlu0.b32.cont [13/16] 0.0, 128
        %1739 = vxpose.xlu0.b32.cont [14/16] 0.0, 128
        %1740 = vxpose.xlu0.b32.cont [15/16] 0.0, 128
        %1741 = vxpose.xlu0.b32.end [16/16] 0.0, 128
        %v1742 = vpop.trf.xlu0
        %v1743 = vpop.trf.xlu0
        %v1744 = vpop.trf.xlu0
        %v1745 = vpop.trf.xlu0
        %v1746 = vpop.trf.xlu0
        %v1747 = vpop.trf.xlu0
        %v1748 = vpop.trf.xlu0
        %v1749 = vpop.trf.xlu0
        %v1750 = vpop.trf.xlu0
        %v1751 = vpop.trf.xlu0
        %v1752 = vpop.trf.xlu0
        %v1753 = vpop.trf.xlu0
        %v1754 = vpop.trf.xlu0
        %v1755 = vpop.trf.xlu0
        %v1756 = vpop.trf.xlu0
        %v1757 = vpop.trf.xlu0
        %1758 = vst.msk [vmem:[%s385] sm:$0xff] %vm421, %v1646
        %1759 = vst.msk [vmem:[%s385 + $0x8] sm:$0xff] %vm421, %v1647
        %1760 = vst.msk [vmem:[%s385 + $0x10] sm:$0xff] %vm421, %v1678
        %1761 = vst.msk [vmem:[%s385 + $0x18] sm:$0xff] %vm421, %v1679
        %1762 = vst.msk [vmem:[%s385 + $0x20] sm:$0xff] %vm421, %v1710
        %1763 = vst.msk [vmem:[%s385 + $0x28] sm:$0xff] %vm421, %v1711
        %1764 = vst.msk [vmem:[%s385 + $0x30] sm:$0xff] %vm421, %v1742
        %1765 = vst.msk [vmem:[%s385 + $0x38] sm:$0xff] %vm421, %v1743
        %1766 = vxpose.xlu0.b32.start [1/16] %v1592, 128
        %1767 = vxpose.xlu0.b32.cont [2/16] %v1597, 128
        %1768 = vxpose.xlu0.b32.cont [3/16] 0.0, 128
        %1769 = vxpose.xlu0.b32.cont [4/16] 0.0, 128
        %1770 = vxpose.xlu0.b32.cont [5/16] 0.0, 128
        %1771 = vxpose.xlu0.b32.cont [6/16] 0.0, 128
        %1772 = vxpose.xlu0.b32.cont [7/16] 0.0, 128
        %1773 = vxpose.xlu0.b32.cont [8/16] 0.0, 128
        %1774 = vxpose.xlu0.b32.cont [9/16] 0.0, 128
        %1775 = vxpose.xlu0.b32.cont [10/16] 0.0, 128
        %1776 = vxpose.xlu0.b32.cont [11/16] 0.0, 128
        %1777 = vxpose.xlu0.b32.cont [12/16] 0.0, 128
        %1778 = vxpose.xlu0.b32.cont [13/16] 0.0, 128
        %1779 = vxpose.xlu0.b32.cont [14/16] 0.0, 128
        %1780 = vxpose.xlu0.b32.cont [15/16] 0.0, 128
        %1781 = vxpose.xlu0.b32.end [16/16] 0.0, 128
        %v1782 = vpop.trf.xlu0
        %v1783 = vpop.trf.xlu0
        %v1784 = vpop.trf.xlu0
        %v1785 = vpop.trf.xlu0
        %v1786 = vpop.trf.xlu0
        %v1787 = vpop.trf.xlu0
        %v1788 = vpop.trf.xlu0
        %v1789 = vpop.trf.xlu0
        %v1790 = vpop.trf.xlu0
        %v1791 = vpop.trf.xlu0
        %v1792 = vpop.trf.xlu0
        %v1793 = vpop.trf.xlu0
        %v1794 = vpop.trf.xlu0
        %v1795 = vpop.trf.xlu0
        %v1796 = vpop.trf.xlu0
        %v1797 = vpop.trf.xlu0
        %1798 = vxpose.xlu0.b32.start [1/16] %v1602, 128
        %1799 = vxpose.xlu0.b32.cont [2/16] %v1607, 128
        %1800 = vxpose.xlu0.b32.cont [3/16] 0.0, 128
        %1801 = vxpose.xlu0.b32.cont [4/16] 0.0, 128
        %1802 = vxpose.xlu0.b32.cont [5/16] 0.0, 128
        %1803 = vxpose.xlu0.b32.cont [6/16] 0.0, 128
        %1804 = vxpose.xlu0.b32.cont [7/16] 0.0, 128
        %1805 = vxpose.xlu0.b32.cont [8/16] 0.0, 128
        %1806 = vxpose.xlu0.b32.cont [9/16] 0.0, 128
        %1807 = vxpose.xlu0.b32.cont [10/16] 0.0, 128
        %1808 = vxpose.xlu0.b32.cont [11/16] 0.0, 128
        %1809 = vxpose.xlu0.b32.cont [12/16] 0.0, 128
        %1810 = vxpose.xlu0.b32.cont [13/16] 0.0, 128
        %1811 = vxpose.xlu0.b32.cont [14/16] 0.0, 128
        %1812 = vxpose.xlu0.b32.cont [15/16] 0.0, 128
        %1813 = vxpose.xlu0.b32.end [16/16] 0.0, 128
        %v1814 = vpop.trf.xlu0
        %v1815 = vpop.trf.xlu0
        %v1816 = vpop.trf.xlu0
        %v1817 = vpop.trf.xlu0
        %v1818 = vpop.trf.xlu0
        %v1819 = vpop.trf.xlu0
        %v1820 = vpop.trf.xlu0
        %v1821 = vpop.trf.xlu0
        %v1822 = vpop.trf.xlu0
        %v1823 = vpop.trf.xlu0
        %v1824 = vpop.trf.xlu0
        %v1825 = vpop.trf.xlu0
        %v1826 = vpop.trf.xlu0
        %v1827 = vpop.trf.xlu0
        %v1828 = vpop.trf.xlu0
        %v1829 = vpop.trf.xlu0
        %1830 = vxpose.xlu0.b32.start [1/16] %v1612, 128
        %1831 = vxpose.xlu0.b32.cont [2/16] %v1617, 128
        %1832 = vxpose.xlu0.b32.cont [3/16] 0.0, 128
        %1833 = vxpose.xlu0.b32.cont [4/16] 0.0, 128
        %1834 = vxpose.xlu0.b32.cont [5/16] 0.0, 128
        %1835 = vxpose.xlu0.b32.cont [6/16] 0.0, 128
        %1836 = vxpose.xlu0.b32.cont [7/16] 0.0, 128
        %1837 = vxpose.xlu0.b32.cont [8/16] 0.0, 128
        %1838 = vxpose.xlu0.b32.cont [9/16] 0.0, 128
        %1839 = vxpose.xlu0.b32.cont [10/16] 0.0, 128
        %1840 = vxpose.xlu0.b32.cont [11/16] 0.0, 128
        %1841 = vxpose.xlu0.b32.cont [12/16] 0.0, 128
        %1842 = vxpose.xlu0.b32.cont [13/16] 0.0, 128
        %1843 = vxpose.xlu0.b32.cont [14/16] 0.0, 128
        %1844 = vxpose.xlu0.b32.cont [15/16] 0.0, 128
        %1845 = vxpose.xlu0.b32.end [16/16] 0.0, 128
        %v1846 = vpop.trf.xlu0
        %v1847 = vpop.trf.xlu0
        %v1848 = vpop.trf.xlu0
        %v1849 = vpop.trf.xlu0
        %v1850 = vpop.trf.xlu0
        %v1851 = vpop.trf.xlu0
        %v1852 = vpop.trf.xlu0
        %v1853 = vpop.trf.xlu0
        %v1854 = vpop.trf.xlu0
        %v1855 = vpop.trf.xlu0
        %v1856 = vpop.trf.xlu0
        %v1857 = vpop.trf.xlu0
        %v1858 = vpop.trf.xlu0
        %v1859 = vpop.trf.xlu0
        %v1860 = vpop.trf.xlu0
        %v1861 = vpop.trf.xlu0
        %1862 = vxpose.xlu0.b32.start [1/16] %v1622, 128
        %1863 = vxpose.xlu0.b32.cont [2/16] %v1627, 128
        %1864 = vxpose.xlu0.b32.cont [3/16] 0.0, 128
        %1865 = vxpose.xlu0.b32.cont [4/16] 0.0, 128
        %1866 = vxpose.xlu0.b32.cont [5/16] 0.0, 128
        %1867 = vxpose.xlu0.b32.cont [6/16] 0.0, 128
        %1868 = vxpose.xlu0.b32.cont [7/16] 0.0, 128
        %1869 = vxpose.xlu0.b32.cont [8/16] 0.0, 128
        %1870 = vxpose.xlu0.b32.cont [9/16] 0.0, 128
        %1871 = vxpose.xlu0.b32.cont [10/16] 0.0, 128
        %1872 = vxpose.xlu0.b32.cont [11/16] 0.0, 128
        %1873 = vxpose.xlu0.b32.cont [12/16] 0.0, 128
        %1874 = vxpose.xlu0.b32.cont [13/16] 0.0, 128
        %1875 = vxpose.xlu0.b32.cont [14/16] 0.0, 128
        %1876 = vxpose.xlu0.b32.cont [15/16] 0.0, 128
        %1877 = vxpose.xlu0.b32.end [16/16] 0.0, 128
        %v1878 = vpop.trf.xlu0
        %v1879 = vpop.trf.xlu0
        %v1880 = vpop.trf.xlu0
        %v1881 = vpop.trf.xlu0
        %v1882 = vpop.trf.xlu0
        %v1883 = vpop.trf.xlu0
        %v1884 = vpop.trf.xlu0
        %v1885 = vpop.trf.xlu0
        %v1886 = vpop.trf.xlu0
        %v1887 = vpop.trf.xlu0
        %v1888 = vpop.trf.xlu0
        %v1889 = vpop.trf.xlu0
        %v1890 = vpop.trf.xlu0
        %v1891 = vpop.trf.xlu0
        %v1892 = vpop.trf.xlu0
        %v1893 = vpop.trf.xlu0
        %1894 = vst.msk [vmem:[%s392] sm:$0xff] %vm421, %v1782
        %1895 = vst.msk [vmem:[%s392 + $0x8] sm:$0xff] %vm421, %v1783
        %1896 = vst.msk [vmem:[%s392 + $0x10] sm:$0xff] %vm421, %v1814
        %1897 = vst.msk [vmem:[%s392 + $0x18] sm:$0xff] %vm421, %v1815
        %1898 = vst.msk [vmem:[%s392 + $0x20] sm:$0xff] %vm421, %v1846
        %1899 = vst.msk [vmem:[%s392 + $0x28] sm:$0xff] %vm421, %v1847
        %1900 = vst.msk [vmem:[%s392 + $0x30] sm:$0xff] %vm421, %v1878
        %1901 = vst.msk [vmem:[%s392 + $0x38] sm:$0xff] %vm421, %v1879
        %s1902 = sand.u32 %s176, 1
        %s1903 = scalar_lea.sflag [#allocation4], %s1902
        %s1904 = sand.u32 %s176, 1
        %s1905 = smul.addr %s1904, 64
        %s1906 = scalar_lea.vmem [#allocation11], %s1905
        %s1907 = sand.u32 %s202, 1
        %s1908 = scalar_lea.sflag [#allocation13], %s1907
        %s1909 = sand.u32 %s202, 1
        %s1910 = smul.addr %s1909, 64
        %s1911 = scalar_lea.vmem [#allocation12], %s1910
        // Predicated region
        $region65: #{tpu_custom_call.1} parent=43 // pred_check
          %p1912 = pneg %p186
        $region66: #{tpu_custom_call.1} parent=43 // pred_check_branch
          %1914 = sbr.rel (%p1912) target = $region68
        $region67: #{tpu_custom_call.1} parent=43 // pred_region
          %s1915 = smul.u32 4, %s32
          %s1917 = ssub.s32 1024, 1024
          %1918 = vsyncadd %s1903, %s1917
          %s1919 = smul.addr %s1915, 2
          %s1920 = smul.addr %s1919, 128
          %s1921 = scalar_lea.hbm %s6, %s1920
          %s1922 = sshll.u32 %s1906, 4
          %s1923 = int_to_ptr.vmem [resolvable:$true] %s1922
          %1928 = dma.vmem_to_hbm [thread:$0]  %s1923, 1024, %s1921, %s1903, 128, 128, 8
        $region68: #{tpu_custom_call.1} parent=43 // pred_fallthru
          _
        // Predicated region
        $region69: #{tpu_custom_call.1} parent=43 // pred_check
          %p1929 = pneg %p212
        $region70: #{tpu_custom_call.1} parent=43 // pred_check_branch
          %1931 = sbr.rel (%p1929) target = $region72
        $region71: #{tpu_custom_call.1} parent=43 // pred_region
          %s1932 = smul.u32 4, %s32
          %s1934 = ssub.s32 1024, 1024
          %1935 = vsyncadd %s1908, %s1934
          %s1936 = smul.addr %s1932, 2
          %s1937 = smul.addr %s1936, 128
          %s1938 = scalar_lea.hbm %s7, %s1937
          %s1939 = sshll.u32 %s1911, 4
          %s1940 = int_to_ptr.vmem [resolvable:$true] %s1939
          %1945 = dma.vmem_to_hbm [thread:$0]  %s1940, 1024, %s1938, %s1908, 128, 128, 8
        $region72: #{tpu_custom_call.1} parent=43 // pred_fallthru
          _
      $region44: #{tpu_custom_call.1} parent=5 // pred_fallthru
        _
      %p1946 = scmp.le.s32.totalorder 2, %s27
      // Predicated region
      $region73: #{tpu_custom_call.1} parent=5 // pred_check
        %p1947 = pneg %p1946
      $region74: #{tpu_custom_call.1} parent=5 // pred_check_branch
        %1949 = sbr.rel (%p1947) target = $region76
      $region75: #{tpu_custom_call.1} parent=5 // pred_region
        %s1950 = ssub.s32 %s27, 2
        // Predicated region
        $region77: #{tpu_custom_call.1} parent=75 // pred_check
          %p1951 = pneg %p192
        $region78: #{tpu_custom_call.1} parent=75 // pred_check_branch
          %1953 = sbr.rel (%p1951) target = $region80
        $region79: #{tpu_custom_call.1} parent=75 // pred_region
          %s1954 = sand.u32 %s177, 1
          %s1955 = scalar_lea.sflag [#allocation4], %s1954
          %s1956 = sand.u32 %s177, 1
          %s1957 = smul.addr %s1956, 64
          %s1958 = scalar_lea.vmem [#allocation11], %s1957
          %1959 = dma.done %s1955, 1024
        $region80: #{tpu_custom_call.1} parent=75 // pred_fallthru
          _
        // Predicated region
        $region81: #{tpu_custom_call.1} parent=75 // pred_check
          %p1960 = pneg %p218
        $region82: #{tpu_custom_call.1} parent=75 // pred_check_branch
          %1962 = sbr.rel (%p1960) target = $region84
        $region83: #{tpu_custom_call.1} parent=75 // pred_region
          %s1963 = sand.u32 %s203, 1
          %s1964 = scalar_lea.sflag [#allocation13], %s1963
          %s1965 = sand.u32 %s203, 1
          %s1966 = smul.addr %s1965, 64
          %s1967 = scalar_lea.vmem [#allocation12], %s1966
          %1968 = dma.done %s1964, 1024
        $region84: #{tpu_custom_call.1} parent=75 // pred_fallthru
          _
      $region76: #{tpu_custom_call.1} parent=5 // pred_fallthru
        _
    $region6: #{tpu_custom_call.1} parent=1 // loop_footer
      %s31 = sadd.s32 1, %s27
    $region7: #{tpu_custom_call.1} parent=1 // loop_footer_branch
      %26 = sbr.rel target = $region3
    $region8: #{tpu_custom_call.1} parent=1 // loop_exit
      _
    %1969 = vsyncpa [#allocation3], 1
    %s1970 = scalar_lea.sflag [#allocation3], 1
    %1971 = vsyncpa %s1970, 1
    %1972 = vsyncpa [#allocation6], 1
    %s1973 = scalar_lea.sflag [#allocation6], 1
    %1974 = vsyncpa %s1973, 1
    %1975 = vsyncpa [#allocation9], 1
    %1976 = vsyncpa [#allocation4], 1
    %s1977 = scalar_lea.sflag [#allocation4], 1
    %1978 = vsyncpa %s1977, 1
    %1979 = vsyncpa [#allocation13], 1
    %s1980 = scalar_lea.sflag [#allocation13], 1
    %1981 = vsyncpa %s1980, 1

</llo_original>
